<compile_context>
chip_gen: v6e
topology: v6e:2x2x1
jax: 0.10.0
libtpu: 0.0.40
codegen_flags: <defaults>
</compile_context>

<pallas_src>
import jax
import jax.numpy as jnp
from jax.experimental import pallas as pl
from jax.experimental.pallas import tpu as pltpu

# ----- hyperparameters ("args") ---------------------------------------------
WINDOW = 10          # args.window_size
TPOINT = 4           # args.tpoint
N_FEATURE = 4        # n_feature
HIDDEN = 32          # args.unit
N_CLASS = 8          # n_class
N_LAYER = 2          # args.layer
BATCH = 2            # batch per forward() call (one "group")

RNN_STEP = WINDOW // TPOINT + (0 if WINDOW % TPOINT == 0 else 1)   # 3
PAD = RNN_STEP * TPOINT - WINDOW                                    # 2
INPUT_DIM = TPOINT * N_FEATURE                                      # 16
OUT_PAD = 128                                                       # lane-dense out slab
BN_EPS = 1e-5

# Batching of independent forward() calls into one pallas_call:
NSEQ = 8                        # independent groups (forward calls) in one launch
GROUPS_PER_TILE = 4             # groups packed per grid instance
ROWS = GROUPS_PER_TILE * BATCH  # 8 -> sublane-full working width
TR = RNN_STEP * ROWS            # 24 rows per grid instance (t-major blocks of ROWS)
NTILES = NSEQ // GROUPS_PER_TILE
assert NSEQ % GROUPS_PER_TILE == 0


# ----- the Pallas kernel -----------------------------------------------------
def transformer_kernel(x_ref, w_in_ref, b_in_ref, gamma_ref, beta_ref, bnsel_ref,
                       wih_ref, whh_ref, bih_ref, bhh_ref,
                       wproj_ref, bproj_ref, w_out_ref, b_out_ref,
                       out_ref, hbuf_ref):
    R = ROWS

    def batchnorm(z):
        # BatchNorm1d(rnn_step), training mode: independent stats per
        # (group, timestep) block of BATCH rows.  bnsel is a block-diagonal
        # averaging matrix (1/(B*H) inside a block), so one small MXU matmul
        # plus one lane reduction gives every row its own block mean --
        # no (T,B,H) reshapes, no per-block slicing.  Two-pass variance.
        m = jnp.sum(jnp.dot(bnsel_ref[...], z, preferred_element_type=jnp.float32),
                    axis=1, keepdims=True)                              # (TR, 1)
        c = z - m
        v = jnp.sum(jnp.dot(bnsel_ref[...], c * c, preferred_element_type=jnp.float32),
                    axis=1, keepdims=True)                              # (TR, 1)
        scale = gamma_ref[...] * jax.lax.rsqrt(v + BN_EPS)              # (TR, 1)
        return c * scale + beta_ref[...]

    # self.input : Linear(input_dim, hidden) over every (group, t, b) row at once.
    h = jnp.dot(x_ref[...], w_in_ref[...],
                preferred_element_type=jnp.float32) + b_in_ref[...]     # (TR, H)
    h = batchnorm(h)

    # TODO(synk): self.input / self.rnns / self.projections / self.out are never
    # defined in the PyTorch __init__; modeled as N_LAYER vanilla tanh-RNN layers
    # (batch_first, zero initial hidden) each followed by Linear(H, H).
    for l in range(N_LAYER):
        # Input-to-hidden matmul hoisted out of the serial recurrence (one MXU
        # call over all timesteps); both RNN biases folded in.
        pre = jnp.dot(h, wih_ref[l], preferred_element_type=jnp.float32) \
              + (bih_ref[l] + bhh_ref[l])                               # (TR, H)

        # Recurrence over T with GROUPS_PER_TILE*BATCH sequences stacked along
        # the sublane axis: each serial step is one full-width matmul shared by
        # all groups.  t=0 has hidden == 0, so its whh matmul is skipped.
        hidden = jnp.tanh(pre[0:R, :])
        hbuf_ref[0:R, :] = hidden
        for t in range(1, RNN_STEP):                # static, tiny trip count
            hidden = jnp.tanh(
                pre[t * R:(t + 1) * R, :]
                + jnp.dot(hidden, whh_ref[l], preferred_element_type=jnp.float32))
            hbuf_ref[t * R:(t + 1) * R, :] = hidden   # flat scratch, aligned rows

        # per-layer projection Linear(H, H) over all timesteps at once.
        h = jnp.dot(hbuf_ref[...], wproj_ref[l],
                    preferred_element_type=jnp.float32) + bproj_ref[l]
        h = batchnorm(h)

    # self.out : Linear(hidden, n_class) then sum over T.
    # sum_t (h_t @ W + b) == (sum_t h_t) @ W + T*b  -> cheap VPU adds first,
    # then one (ROWS, H) x (H, 128) matmul into a lane-dense, sublane-full slab.
    hsum = h[0:R, :]
    for t in range(1, RNN_STEP):
        hsum = hsum + h[t * R:(t + 1) * R, :]
    y = jnp.dot(hsum, w_out_ref[...], preferred_element_type=jnp.float32)
    out_ref[...] = (y + RNN_STEP * b_out_ref[...]).astype(out_ref.dtype)


# ----- wrapper ---------------------------------------------------------------
def _const_spec(shape):
    nd = len(shape)
    return pl.BlockSpec(shape, lambda i, _nd=nd: (0,) * _nd)   # VMEM-resident weights


@jax.jit
def transformer_forward(x, p):
    # x: (NSEQ, BATCH, WINDOW, N_FEATURE) -- NSEQ independent forward() calls
    # batched into one pallas_call; each keeps its own BatchNorm batch stats.
    nseq, b = x.shape[0], x.shape[1]

    # glue (plain XLA): ZeroPad2d((0, 0, PAD, 0)) + view(b, T, tpoint*n_feature),
    # then pack GROUPS_PER_TILE groups per grid instance with row order
    # row = t*ROWS + g*BATCH + b, so every per-t slab in the kernel is an
    # aligned (8, H) sublane tile.
    xp = jax.lax.pad(x, jnp.float32(0.0),
                     ((0, 0, 0), (0, 0, 0), (PAD, 0, 0), (0, 0, 0)))
    xr = xp.reshape(nseq, b, RNN_STEP, INPUT_DIM)
    xr = xr.reshape(NTILES, GROUPS_PER_TILE, b, RNN_STEP, INPUT_DIM)
    xr = xr.transpose(0, 3, 1, 2, 4)                          # (NT, T, G, B, D)
    xr = xr.reshape(NTILES * TR, INPUT_DIM)

    # Per-row BN affine params (indexed by t) and the block-diagonal block-mean
    # selector that folds BN's per-(group, t) reduction into one matmul.
    gamma_row = jnp.repeat(p['gamma'], ROWS)[:, None]         # (TR, 1)
    beta_row = jnp.repeat(p['beta'], ROWS)[:, None]           # (TR, 1)
    blk = jnp.arange(TR, dtype=jnp.int32) // BATCH
    bnsel = (blk[:, None] == blk[None, :]).astype(jnp.float32) / (BATCH * HIDDEN)

    # lane-dense output slab: pad the out projection to 128 lanes.
    w_out_p = jnp.pad(p['w_out'], ((0, 0), (0, OUT_PAD - N_CLASS)))
    b_out_p = jnp.pad(p['b_out'], ((0, 0), (0, OUT_PAD - N_CLASS)))

    weights = (p['w_in'], p['b_in'], gamma_row, beta_row, bnsel,
               p['wih'], p['whh'], p['bih'], p['bhh'],
               p['wproj'], p['bproj'], w_out_p, b_out_p)

    out = pl.pallas_call(
        transformer_kernel,
        out_shape=jax.ShapeDtypeStruct((NTILES * ROWS, OUT_PAD), jnp.float32),
        grid=(NTILES,),
        in_specs=[pl.BlockSpec((TR, INPUT_DIM), lambda i: (i, 0))]
                 + [_const_spec(w.shape) for w in weights],
        out_specs=pl.BlockSpec((ROWS, OUT_PAD), lambda i: (i, 0)),
        scratch_shapes=[pltpu.VMEM((TR, HIDDEN), jnp.float32)],
        compiler_params=pltpu.CompilerParams(
            dimension_semantics=("parallel",)),
    )(xr, *weights)

    out = out.reshape(NTILES, GROUPS_PER_TILE, b, OUT_PAD)
    return out.reshape(nseq, b, OUT_PAD)[:, :, :N_CLASS]


# ----- pure-JAX reference (one forward() call, independent formulation) ------
def reference_forward_one(x, p):
    B = x.shape[0]
    xp = jnp.concatenate([jnp.zeros((B, PAD, N_FEATURE), x.dtype), x], axis=1)
    h = xp.reshape(B, RNN_STEP, INPUT_DIM)
    gamma = p['gamma'].reshape(1, RNN_STEP, 1)
    beta = p['beta'].reshape(1, RNN_STEP, 1)

    def bn(z):
        m = jnp.mean(z, axis=(0, 2), keepdims=True)
        v = jnp.mean((z - m) ** 2, axis=(0, 2), keepdims=True)
        return (z - m) * jax.lax.rsqrt(v + BN_EPS) * gamma + beta

    h = jnp.einsum('btd,dh->bth', h, p['w_in']) + p['b_in']
    h = bn(h)
    for l in range(N_LAYER):
        hid = jnp.zeros((B, HIDDEN), jnp.float32)
        outs = []
        for t in range(RNN_STEP):
            hid = jnp.tanh(h[:, t, :] @ p['wih'][l] + p['bih'][l]
                           + hid @ p['whh'][l] + p['bhh'][l])
            outs.append(hid)
        h = jnp.stack(outs, axis=1)
        h = jnp.einsum('bth,ho->bto', h, p['wproj'][l]) + p['bproj'][l]
        h = bn(h)
    y = jnp.einsum('bth,hc->btc', h, p['w_out']) + p['b_out']
    return jnp.sum(y, axis=1)


# ----- main ------------------------------------------------------------------
if __name__ == "__main__":
    key = jax.random.PRNGKey(0)
    ks = jax.random.split(key, 14)
    s = 0.1
    params = {
        'w_in':  s * jax.random.normal(ks[0], (INPUT_DIM, HIDDEN), jnp.float32),
        'b_in':  s * jax.random.normal(ks[1], (1, HIDDEN), jnp.float32),
        'gamma': 1.0 + s * jax.random.normal(ks[2], (RNN_STEP,), jnp.float32),
        'beta':  s * jax.random.normal(ks[3], (RNN_STEP,), jnp.float32),
        'wih':   s * jax.random.normal(ks[4], (N_LAYER, HIDDEN, HIDDEN), jnp.float32),
        'whh':   s * jax.random.normal(ks[5], (N_LAYER, HIDDEN, HIDDEN), jnp.float32),
        'bih':   s * jax.random.normal(ks[6], (N_LAYER, 1, HIDDEN), jnp.float32),
        'bhh':   s * jax.random.normal(ks[7], (N_LAYER, 1, HIDDEN), jnp.float32),
        'wproj': s * jax.random.normal(ks[8], (N_LAYER, HIDDEN, HIDDEN), jnp.float32),
        'bproj': s * jax.random.normal(ks[9], (N_LAYER, 1, HIDDEN), jnp.float32),
        'w_out': s * jax.random.normal(ks[10], (HIDDEN, N_CLASS), jnp.float32),
        'b_out': s * jax.random.normal(ks[11], (1, N_CLASS), jnp.float32),
    }
    x = jax.random.normal(ks[12], (NSEQ, BATCH, WINDOW, N_FEATURE), jnp.float32)

    out = jax.block_until_ready(transformer_forward(x, params))
    ref = jnp.stack([reference_forward_one(x[i], params) for i in range(NSEQ)])
    ref = jax.block_until_ready(ref)

    assert out.shape == (NSEQ, BATCH, N_CLASS)
    assert bool(jnp.all(jnp.isfinite(out)))
    assert bool(jnp.allclose(out, ref, atol=1e-4, rtol=1e-4)), \
        f"max abs diff {float(jnp.max(jnp.abs(out - ref)))}"
    print("KERNEL_OK")
</pallas_src>

<mosaic_0001>
module attributes {stable_mosaic.version = 11 : i64} {
  func.func @transformer_kernel(%arg0: i32, %arg1: memref<24x16xf32, #tpu.memory_space<vmem>>, %arg2: memref<16x32xf32, #tpu.memory_space<vmem>>, %arg3: memref<1x32xf32, #tpu.memory_space<vmem>>, %arg4: memref<24x1xf32, #tpu.memory_space<vmem>>, %arg5: memref<24x1xf32, #tpu.memory_space<vmem>>, %arg6: memref<24x24xf32, #tpu.memory_space<vmem>>, %arg7: memref<2x32x32xf32, #tpu.memory_space<vmem>>, %arg8: memref<2x32x32xf32, #tpu.memory_space<vmem>>, %arg9: memref<2x1x32xf32, #tpu.memory_space<vmem>>, %arg10: memref<2x1x32xf32, #tpu.memory_space<vmem>>, %arg11: memref<2x32x32xf32, #tpu.memory_space<vmem>>, %arg12: memref<2x1x32xf32, #tpu.memory_space<vmem>>, %arg13: memref<32x128xf32, #tpu.memory_space<vmem>>, %arg14: memref<1x128xf32, #tpu.memory_space<vmem>>, %arg15: memref<8x128xf32, #tpu.memory_space<vmem>>, %arg16: memref<24x32xf32, #tpu.memory_space<vmem>>) attributes {dimension_semantics = [#tpu.dimension_semantics<parallel>], iteration_bounds = array<i64: 2>, scalar_prefetch = 0 : i64, scratch_operands = 1 : i64, tpu.core_type = #tpu.core_type<tc>, window_params = [{transform_indices = @transform_0, window_bounds = array<i64: 24, 16>}, {pipeline_mode = #tpu.pipeline_mode<synchronous>, transform_indices = @transform_1, window_bounds = array<i64: 16, 32>}, {pipeline_mode = #tpu.pipeline_mode<synchronous>, transform_indices = @transform_2, window_bounds = array<i64: 1, 32>}, {pipeline_mode = #tpu.pipeline_mode<synchronous>, transform_indices = @transform_3, window_bounds = array<i64: 24, 1>}, {pipeline_mode = #tpu.pipeline_mode<synchronous>, transform_indices = @transform_4, window_bounds = array<i64: 24, 1>}, {pipeline_mode = #tpu.pipeline_mode<synchronous>, transform_indices = @transform_5, window_bounds = array<i64: 24, 24>}, {pipeline_mode = #tpu.pipeline_mode<synchronous>, transform_indices = @transform_6, window_bounds = array<i64: 2, 32, 32>}, {pipeline_mode = #tpu.pipeline_mode<synchronous>, transform_indices = @transform_7, window_bounds = array<i64: 2, 32, 32>}, {pipeline_mode = #tpu.pipeline_mode<synchronous>, transform_indices = @transform_8, window_bounds = array<i64: 2, 1, 32>}, {pipeline_mode = #tpu.pipeline_mode<synchronous>, transform_indices = @transform_9, window_bounds = array<i64: 2, 1, 32>}, {pipeline_mode = #tpu.pipeline_mode<synchronous>, transform_indices = @transform_10, window_bounds = array<i64: 2, 32, 32>}, {pipeline_mode = #tpu.pipeline_mode<synchronous>, transform_indices = @transform_11, window_bounds = array<i64: 2, 1, 32>}, {pipeline_mode = #tpu.pipeline_mode<synchronous>, transform_indices = @transform_12, window_bounds = array<i64: 32, 128>}, {pipeline_mode = #tpu.pipeline_mode<synchronous>, transform_indices = @transform_13, window_bounds = array<i64: 1, 128>}, {transform_indices = @transform_14, window_bounds = array<i64: 8, 128>}]} {
    %c0 = arith.constant 0 : index
    %c0_0 = arith.constant 0 : index
    %0 = vector.load %arg1[%c0, %c0_0] : memref<24x16xf32, #tpu.memory_space<vmem>>, vector<24x16xf32>
    %c0_1 = arith.constant 0 : index
    %c0_2 = arith.constant 0 : index
    %1 = vector.load %arg2[%c0_1, %c0_2] : memref<16x32xf32, #tpu.memory_space<vmem>>, vector<16x32xf32>
    %cst = arith.constant dense<0.000000e+00> : vector<24x32xf32>
    %2 = tpu.matmul %0, %1, %cst {dimension_numbers = #tpu.dot_dimension_numbers<[1], [0], [0], [1], [0, 0, 1, 1], [], []>} : vector<24x16xf32>, vector<16x32xf32>, vector<24x32xf32> -> vector<24x32xf32>
    %c0_3 = arith.constant 0 : index
    %c0_4 = arith.constant 0 : index
    %3 = vector.load %arg3[%c0_3, %c0_4] : memref<1x32xf32, #tpu.memory_space<vmem>>, vector<1x32xf32>
    %4 = vector.broadcast %3 : vector<1x32xf32> to vector<24x32xf32>
    %5 = arith.addf %2, %4 : vector<24x32xf32>
    %c0_5 = arith.constant 0 : index
    %c0_6 = arith.constant 0 : index
    %6 = vector.load %arg6[%c0_5, %c0_6] : memref<24x24xf32, #tpu.memory_space<vmem>>, vector<24x24xf32>
    %cst_7 = arith.constant dense<0.000000e+00> : vector<24x32xf32>
    %7 = tpu.matmul %6, %5, %cst_7 {dimension_numbers = #tpu.dot_dimension_numbers<[1], [0], [0], [1], [0, 0, 1, 1], [], []>} : vector<24x24xf32>, vector<24x32xf32>, vector<24x32xf32> -> vector<24x32xf32>
    %cst_8 = arith.constant dense<0.000000e+00> : vector<24xf32>
    %8 = vector.multi_reduction <add>, %7, %cst_8 [1] : vector<24x32xf32> to vector<24xf32>
    %9 = vector.shape_cast %8 : vector<24xf32> to vector<24x1xf32>
    %10 = vector.broadcast %9 : vector<24x1xf32> to vector<24x32xf32>
    %11 = arith.subf %5, %10 : vector<24x32xf32>
    %c0_9 = arith.constant 0 : index
    %c0_10 = arith.constant 0 : index
    %12 = vector.load %arg6[%c0_9, %c0_10] : memref<24x24xf32, #tpu.memory_space<vmem>>, vector<24x24xf32>
    %13 = arith.mulf %11, %11 : vector<24x32xf32>
    %cst_11 = arith.constant dense<0.000000e+00> : vector<24x32xf32>
    %14 = tpu.matmul %12, %13, %cst_11 {dimension_numbers = #tpu.dot_dimension_numbers<[1], [0], [0], [1], [0, 0, 1, 1], [], []>} : vector<24x24xf32>, vector<24x32xf32>, vector<24x32xf32> -> vector<24x32xf32>
    %cst_12 = arith.constant dense<0.000000e+00> : vector<24xf32>
    %15 = vector.multi_reduction <add>, %14, %cst_12 [1] : vector<24x32xf32> to vector<24xf32>
    %16 = vector.shape_cast %15 : vector<24xf32> to vector<24x1xf32>
    %c0_13 = arith.constant 0 : index
    %c0_14 = arith.constant 0 : index
    %17 = vector.load %arg4[%c0_13, %c0_14] : memref<24x1xf32, #tpu.memory_space<vmem>>, vector<24x1xf32>
    %cst_15 = arith.constant 9.99999974E-6 : f32
    %18 = vector.broadcast %cst_15 : f32 to vector<24x1xf32>
    %19 = arith.addf %16, %18 : vector<24x1xf32>
    %20 = math.rsqrt %19 : vector<24x1xf32>
    %21 = arith.mulf %17, %20 : vector<24x1xf32>
    %22 = vector.broadcast %21 : vector<24x1xf32> to vector<24x32xf32>
    %23 = arith.mulf %11, %22 : vector<24x32xf32>
    %c0_16 = arith.constant 0 : index
    %c0_17 = arith.constant 0 : index
    %24 = vector.load %arg5[%c0_16, %c0_17] : memref<24x1xf32, #tpu.memory_space<vmem>>, vector<24x1xf32>
    %25 = vector.broadcast %24 : vector<24x1xf32> to vector<24x32xf32>
    %26 = arith.addf %23, %25 : vector<24x32xf32>
    %c0_18 = arith.constant 0 : index
    %c0_19 = arith.constant 0 : index
    %c0_20 = arith.constant 0 : index
    %27 = vector.load %arg7[%c0_18, %c0_19, %c0_20] : memref<2x32x32xf32, #tpu.memory_space<vmem>>, vector<1x32x32xf32>
    %28 = vector.shape_cast %27 : vector<1x32x32xf32> to vector<32x32xf32>
    %cst_21 = arith.constant dense<0.000000e+00> : vector<24x32xf32>
    %29 = tpu.matmul %26, %28, %cst_21 {dimension_numbers = #tpu.dot_dimension_numbers<[1], [0], [0], [1], [0, 0, 1, 1], [], []>} : vector<24x32xf32>, vector<32x32xf32>, vector<24x32xf32> -> vector<24x32xf32>
    %c0_22 = arith.constant 0 : index
    %c0_23 = arith.constant 0 : index
    %c0_24 = arith.constant 0 : index
    %30 = vector.load %arg9[%c0_22, %c0_23, %c0_24] : memref<2x1x32xf32, #tpu.memory_space<vmem>>, vector<1x1x32xf32>
    %31 = vector.shape_cast %30 : vector<1x1x32xf32> to vector<1x32xf32>
    %c0_25 = arith.constant 0 : index
    %c0_26 = arith.constant 0 : index
    %c0_27 = arith.constant 0 : index
    %32 = vector.load %arg10[%c0_25, %c0_26, %c0_27] : memref<2x1x32xf32, #tpu.memory_space<vmem>>, vector<1x1x32xf32>
    %33 = vector.shape_cast %32 : vector<1x1x32xf32> to vector<1x32xf32>
    %34 = arith.addf %31, %33 : vector<1x32xf32>
    %35 = vector.broadcast %34 : vector<1x32xf32> to vector<24x32xf32>
    %36 = arith.addf %29, %35 : vector<24x32xf32>
    %37 = vector.extract_strided_slice %36 {offsets = [0, 0], sizes = [8, 32], strides = [1, 1]} : vector<24x32xf32> to vector<8x32xf32>
    %38 = math.tanh %37 : vector<8x32xf32>
    %c0_28 = arith.constant 0 : index
    %c0_29 = arith.constant 0 : index
    %39 = vector.load %arg16[%c0_28, %c0_29] : memref<24x32xf32, #tpu.memory_space<vmem>>, vector<8x32xf32>
    tpu.vector_store %arg16[%c0_28, %c0_29], %38 {strides = array<i32>} : memref<24x32xf32, #tpu.memory_space<vmem>>, vector<8x32xf32>,
    %40 = vector.extract_strided_slice %36 {offsets = [8, 0], sizes = [8, 32], strides = [1, 1]} : vector<24x32xf32> to vector<8x32xf32>
    %c0_30 = arith.constant 0 : index
    %c0_31 = arith.constant 0 : index
    %c0_32 = arith.constant 0 : index
    %41 = vector.load %arg8[%c0_30, %c0_31, %c0_32] : memref<2x32x32xf32, #tpu.memory_space<vmem>>, vector<1x32x32xf32>
    %42 = vector.shape_cast %41 : vector<1x32x32xf32> to vector<32x32xf32>
    %cst_33 = arith.constant dense<0.000000e+00> : vector<8x32xf32>
    %43 = tpu.matmul %38, %42, %cst_33 {dimension_numbers = #tpu.dot_dimension_numbers<[1], [0], [0], [1], [0, 0, 1, 1], [], []>} : vector<8x32xf32>, vector<32x32xf32>, vector<8x32xf32> -> vector<8x32xf32>
    %44 = arith.addf %40, %43 : vector<8x32xf32>
    %45 = math.tanh %44 : vector<8x32xf32>
    %c8 = arith.constant 8 : index
    %c0_34 = arith.constant 0 : index
    %46 = vector.load %arg16[%c8, %c0_34] : memref<24x32xf32, #tpu.memory_space<vmem>>, vector<8x32xf32>
    tpu.vector_store %arg16[%c8, %c0_34], %45 {strides = array<i32>} : memref<24x32xf32, #tpu.memory_space<vmem>>, vector<8x32xf32>,
    %47 = vector.extract_strided_slice %36 {offsets = [16, 0], sizes = [8, 32], strides = [1, 1]} : vector<24x32xf32> to vector<8x32xf32>
    %c0_35 = arith.constant 0 : index
    %c0_36 = arith.constant 0 : index
    %c0_37 = arith.constant 0 : index
    %48 = vector.load %arg8[%c0_35, %c0_36, %c0_37] : memref<2x32x32xf32, #tpu.memory_space<vmem>>, vector<1x32x32xf32>
    %49 = vector.shape_cast %48 : vector<1x32x32xf32> to vector<32x32xf32>
    %cst_38 = arith.constant dense<0.000000e+00> : vector<8x32xf32>
    %50 = tpu.matmul %45, %49, %cst_38 {dimension_numbers = #tpu.dot_dimension_numbers<[1], [0], [0], [1], [0, 0, 1, 1], [], []>} : vector<8x32xf32>, vector<32x32xf32>, vector<8x32xf32> -> vector<8x32xf32>
    %51 = arith.addf %47, %50 : vector<8x32xf32>
    %52 = math.tanh %51 : vector<8x32xf32>
    %c16 = arith.constant 16 : index
    %c0_39 = arith.constant 0 : index
    %53 = vector.load %arg16[%c16, %c0_39] : memref<24x32xf32, #tpu.memory_space<vmem>>, vector<8x32xf32>
    tpu.vector_store %arg16[%c16, %c0_39], %52 {strides = array<i32>} : memref<24x32xf32, #tpu.memory_space<vmem>>, vector<8x32xf32>,
    %c0_40 = arith.constant 0 : index
    %c0_41 = arith.constant 0 : index
    %54 = vector.load %arg16[%c0_40, %c0_41] : memref<24x32xf32, #tpu.memory_space<vmem>>, vector<24x32xf32>
    %c0_42 = arith.constant 0 : index
    %c0_43 = arith.constant 0 : index
    %c0_44 = arith.constant 0 : index
    %55 = vector.load %arg11[%c0_42, %c0_43, %c0_44] : memref<2x32x32xf32, #tpu.memory_space<vmem>>, vector<1x32x32xf32>
    %56 = vector.shape_cast %55 : vector<1x32x32xf32> to vector<32x32xf32>
    %cst_45 = arith.constant dense<0.000000e+00> : vector<24x32xf32>
    %57 = tpu.matmul %54, %56, %cst_45 {dimension_numbers = #tpu.dot_dimension_numbers<[1], [0], [0], [1], [0, 0, 1, 1], [], []>} : vector<24x32xf32>, vector<32x32xf32>, vector<24x32xf32> -> vector<24x32xf32>
    %c0_46 = arith.constant 0 : index
    %c0_47 = arith.constant 0 : index
    %c0_48 = arith.constant 0 : index
    %58 = vector.load %arg12[%c0_46, %c0_47, %c0_48] : memref<2x1x32xf32, #tpu.memory_space<vmem>>, vector<1x1x32xf32>
    %59 = vector.shape_cast %58 : vector<1x1x32xf32> to vector<1x32xf32>
    %60 = vector.broadcast %59 : vector<1x32xf32> to vector<24x32xf32>
    %61 = arith.addf %57, %60 : vector<24x32xf32>
    %c0_49 = arith.constant 0 : index
    %c0_50 = arith.constant 0 : index
    %62 = vector.load %arg6[%c0_49, %c0_50] : memref<24x24xf32, #tpu.memory_space<vmem>>, vector<24x24xf32>
    %cst_51 = arith.constant dense<0.000000e+00> : vector<24x32xf32>
    %63 = tpu.matmul %62, %61, %cst_51 {dimension_numbers = #tpu.dot_dimension_numbers<[1], [0], [0], [1], [0, 0, 1, 1], [], []>} : vector<24x24xf32>, vector<24x32xf32>, vector<24x32xf32> -> vector<24x32xf32>
    %cst_52 = arith.constant dense<0.000000e+00> : vector<24xf32>
    %64 = vector.multi_reduction <add>, %63, %cst_52 [1] : vector<24x32xf32> to vector<24xf32>
    %65 = vector.shape_cast %64 : vector<24xf32> to vector<24x1xf32>
    %66 = vector.broadcast %65 : vector<24x1xf32> to vector<24x32xf32>
    %67 = arith.subf %61, %66 : vector<24x32xf32>
    %c0_53 = arith.constant 0 : index
    %c0_54 = arith.constant 0 : index
    %68 = vector.load %arg6[%c0_53, %c0_54] : memref<24x24xf32, #tpu.memory_space<vmem>>, vector<24x24xf32>
    %69 = arith.mulf %67, %67 : vector<24x32xf32>
    %cst_55 = arith.constant dense<0.000000e+00> : vector<24x32xf32>
    %70 = tpu.matmul %68, %69, %cst_55 {dimension_numbers = #tpu.dot_dimension_numbers<[1], [0], [0], [1], [0, 0, 1, 1], [], []>} : vector<24x24xf32>, vector<24x32xf32>, vector<24x32xf32> -> vector<24x32xf32>
    %cst_56 = arith.constant dense<0.000000e+00> : vector<24xf32>
    %71 = vector.multi_reduction <add>, %70, %cst_56 [1] : vector<24x32xf32> to vector<24xf32>
    %72 = vector.shape_cast %71 : vector<24xf32> to vector<24x1xf32>
    %c0_57 = arith.constant 0 : index
    %c0_58 = arith.constant 0 : index
    %73 = vector.load %arg4[%c0_57, %c0_58] : memref<24x1xf32, #tpu.memory_space<vmem>>, vector<24x1xf32>
    %cst_59 = arith.constant 9.99999974E-6 : f32
    %74 = vector.broadcast %cst_59 : f32 to vector<24x1xf32>
    %75 = arith.addf %72, %74 : vector<24x1xf32>
    %76 = math.rsqrt %75 : vector<24x1xf32>
    %77 = arith.mulf %73, %76 : vector<24x1xf32>
    %78 = vector.broadcast %77 : vector<24x1xf32> to vector<24x32xf32>
    %79 = arith.mulf %67, %78 : vector<24x32xf32>
    %c0_60 = arith.constant 0 : index
    %c0_61 = arith.constant 0 : index
    %80 = vector.load %arg5[%c0_60, %c0_61] : memref<24x1xf32, #tpu.memory_space<vmem>>, vector<24x1xf32>
    %81 = vector.broadcast %80 : vector<24x1xf32> to vector<24x32xf32>
    %82 = arith.addf %79, %81 : vector<24x32xf32>
    %c1 = arith.constant 1 : index
    %c0_62 = arith.constant 0 : index
    %c0_63 = arith.constant 0 : index
    %83 = vector.load %arg7[%c1, %c0_62, %c0_63] : memref<2x32x32xf32, #tpu.memory_space<vmem>>, vector<1x32x32xf32>
    %84 = vector.shape_cast %83 : vector<1x32x32xf32> to vector<32x32xf32>
    %cst_64 = arith.constant dense<0.000000e+00> : vector<24x32xf32>
    %85 = tpu.matmul %82, %84, %cst_64 {dimension_numbers = #tpu.dot_dimension_numbers<[1], [0], [0], [1], [0, 0, 1, 1], [], []>} : vector<24x32xf32>, vector<32x32xf32>, vector<24x32xf32> -> vector<24x32xf32>
    %c1_65 = arith.constant 1 : index
    %c0_66 = arith.constant 0 : index
    %c0_67 = arith.constant 0 : index
    %86 = vector.load %arg9[%c1_65, %c0_66, %c0_67] : memref<2x1x32xf32, #tpu.memory_space<vmem>>, vector<1x1x32xf32>
    %87 = vector.shape_cast %86 : vector<1x1x32xf32> to vector<1x32xf32>
    %c1_68 = arith.constant 1 : index
    %c0_69 = arith.constant 0 : index
    %c0_70 = arith.constant 0 : index
    %88 = vector.load %arg10[%c1_68, %c0_69, %c0_70] : memref<2x1x32xf32, #tpu.memory_space<vmem>>, vector<1x1x32xf32>
    %89 = vector.shape_cast %88 : vector<1x1x32xf32> to vector<1x32xf32>
    %90 = arith.addf %87, %89 : vector<1x32xf32>
    %91 = vector.broadcast %90 : vector<1x32xf32> to vector<24x32xf32>
    %92 = arith.addf %85, %91 : vector<24x32xf32>
    %93 = vector.extract_strided_slice %92 {offsets = [0, 0], sizes = [8, 32], strides = [1, 1]} : vector<24x32xf32> to vector<8x32xf32>
    %94 = math.tanh %93 : vector<8x32xf32>
    %c0_71 = arith.constant 0 : index
    %c0_72 = arith.constant 0 : index
    %95 = vector.load %arg16[%c0_71, %c0_72] : memref<24x32xf32, #tpu.memory_space<vmem>>, vector<8x32xf32>
    tpu.vector_store %arg16[%c0_71, %c0_72], %94 {strides = array<i32>} : memref<24x32xf32, #tpu.memory_space<vmem>>, vector<8x32xf32>,
    %96 = vector.extract_strided_slice %92 {offsets = [8, 0], sizes = [8, 32], strides = [1, 1]} : vector<24x32xf32> to vector<8x32xf32>
    %c1_73 = arith.constant 1 : index
    %c0_74 = arith.constant 0 : index
    %c0_75 = arith.constant 0 : index
    %97 = vector.load %arg8[%c1_73, %c0_74, %c0_75] : memref<2x32x32xf32, #tpu.memory_space<vmem>>, vector<1x32x32xf32>
    %98 = vector.shape_cast %97 : vector<1x32x32xf32> to vector<32x32xf32>
    %cst_76 = arith.constant dense<0.000000e+00> : vector<8x32xf32>
    %99 = tpu.matmul %94, %98, %cst_76 {dimension_numbers = #tpu.dot_dimension_numbers<[1], [0], [0], [1], [0, 0, 1, 1], [], []>} : vector<8x32xf32>, vector<32x32xf32>, vector<8x32xf32> -> vector<8x32xf32>
    %100 = arith.addf %96, %99 : vector<8x32xf32>
    %101 = math.tanh %100 : vector<8x32xf32>
    %c8_77 = arith.constant 8 : index
    %c0_78 = arith.constant 0 : index
    %102 = vector.load %arg16[%c8_77, %c0_78] : memref<24x32xf32, #tpu.memory_space<vmem>>, vector<8x32xf32>
    tpu.vector_store %arg16[%c8_77, %c0_78], %101 {strides = array<i32>} : memref<24x32xf32, #tpu.memory_space<vmem>>, vector<8x32xf32>,
    %103 = vector.extract_strided_slice %92 {offsets = [16, 0], sizes = [8, 32], strides = [1, 1]} : vector<24x32xf32> to vector<8x32xf32>
    %c1_79 = arith.constant 1 : index
    %c0_80 = arith.constant 0 : index
    %c0_81 = arith.constant 0 : index
    %104 = vector.load %arg8[%c1_79, %c0_80, %c0_81] : memref<2x32x32xf32, #tpu.memory_space<vmem>>, vector<1x32x32xf32>
    %105 = vector.shape_cast %104 : vector<1x32x32xf32> to vector<32x32xf32>
    %cst_82 = arith.constant dense<0.000000e+00> : vector<8x32xf32>
    %106 = tpu.matmul %101, %105, %cst_82 {dimension_numbers = #tpu.dot_dimension_numbers<[1], [0], [0], [1], [0, 0, 1, 1], [], []>} : vector<8x32xf32>, vector<32x32xf32>, vector<8x32xf32> -> vector<8x32xf32>
    %107 = arith.addf %103, %106 : vector<8x32xf32>
    %108 = math.tanh %107 : vector<8x32xf32>
    %c16_83 = arith.constant 16 : index
    %c0_84 = arith.constant 0 : index
    %109 = vector.load %arg16[%c16_83, %c0_84] : memref<24x32xf32, #tpu.memory_space<vmem>>, vector<8x32xf32>
    tpu.vector_store %arg16[%c16_83, %c0_84], %108 {strides = array<i32>} : memref<24x32xf32, #tpu.memory_space<vmem>>, vector<8x32xf32>,
    %c0_85 = arith.constant 0 : index
    %c0_86 = arith.constant 0 : index
    %110 = vector.load %arg16[%c0_85, %c0_86] : memref<24x32xf32, #tpu.memory_space<vmem>>, vector<24x32xf32>
    %c1_87 = arith.constant 1 : index
    %c0_88 = arith.constant 0 : index
    %c0_89 = arith.constant 0 : index
    %111 = vector.load %arg11[%c1_87, %c0_88, %c0_89] : memref<2x32x32xf32, #tpu.memory_space<vmem>>, vector<1x32x32xf32>
    %112 = vector.shape_cast %111 : vector<1x32x32xf32> to vector<32x32xf32>
    %cst_90 = arith.constant dense<0.000000e+00> : vector<24x32xf32>
    %113 = tpu.matmul %110, %112, %cst_90 {dimension_numbers = #tpu.dot_dimension_numbers<[1], [0], [0], [1], [0, 0, 1, 1], [], []>} : vector<24x32xf32>, vector<32x32xf32>, vector<24x32xf32> -> vector<24x32xf32>
    %c1_91 = arith.constant 1 : index
    %c0_92 = arith.constant 0 : index
    %c0_93 = arith.constant 0 : index
    %114 = vector.load %arg12[%c1_91, %c0_92, %c0_93] : memref<2x1x32xf32, #tpu.memory_space<vmem>>, vector<1x1x32xf32>
    %115 = vector.shape_cast %114 : vector<1x1x32xf32> to vector<1x32xf32>
    %116 = vector.broadcast %115 : vector<1x32xf32> to vector<24x32xf32>
    %117 = arith.addf %113, %116 : vector<24x32xf32>
    %c0_94 = arith.constant 0 : index
    %c0_95 = arith.constant 0 : index
    %118 = vector.load %arg6[%c0_94, %c0_95] : memref<24x24xf32, #tpu.memory_space<vmem>>, vector<24x24xf32>
    %cst_96 = arith.constant dense<0.000000e+00> : vector<24x32xf32>
    %119 = tpu.matmul %118, %117, %cst_96 {dimension_numbers = #tpu.dot_dimension_numbers<[1], [0], [0], [1], [0, 0, 1, 1], [], []>} : vector<24x24xf32>, vector<24x32xf32>, vector<24x32xf32> -> vector<24x32xf32>
    %cst_97 = arith.constant dense<0.000000e+00> : vector<24xf32>
    %120 = vector.multi_reduction <add>, %119, %cst_97 [1] : vector<24x32xf32> to vector<24xf32>
    %121 = vector.shape_cast %120 : vector<24xf32> to vector<24x1xf32>
    %122 = vector.broadcast %121 : vector<24x1xf32> to vector<24x32xf32>
    %123 = arith.subf %117, %122 : vector<24x32xf32>
    %c0_98 = arith.constant 0 : index
    %c0_99 = arith.constant 0 : index
    %124 = vector.load %arg6[%c0_98, %c0_99] : memref<24x24xf32, #tpu.memory_space<vmem>>, vector<24x24xf32>
    %125 = arith.mulf %123, %123 : vector<24x32xf32>
    %cst_100 = arith.constant dense<0.000000e+00> : vector<24x32xf32>
    %126 = tpu.matmul %124, %125, %cst_100 {dimension_numbers = #tpu.dot_dimension_numbers<[1], [0], [0], [1], [0, 0, 1, 1], [], []>} : vector<24x24xf32>, vector<24x32xf32>, vector<24x32xf32> -> vector<24x32xf32>
    %cst_101 = arith.constant dense<0.000000e+00> : vector<24xf32>
    %127 = vector.multi_reduction <add>, %126, %cst_101 [1] : vector<24x32xf32> to vector<24xf32>
    %128 = vector.shape_cast %127 : vector<24xf32> to vector<24x1xf32>
    %c0_102 = arith.constant 0 : index
    %c0_103 = arith.constant 0 : index
    %129 = vector.load %arg4[%c0_102, %c0_103] : memref<24x1xf32, #tpu.memory_space<vmem>>, vector<24x1xf32>
    %cst_104 = arith.constant 9.99999974E-6 : f32
    %130 = vector.broadcast %cst_104 : f32 to vector<24x1xf32>
    %131 = arith.addf %128, %130 : vector<24x1xf32>
    %132 = math.rsqrt %131 : vector<24x1xf32>
    %133 = arith.mulf %129, %132 : vector<24x1xf32>
    %134 = vector.broadcast %133 : vector<24x1xf32> to vector<24x32xf32>
    %135 = arith.mulf %123, %134 : vector<24x32xf32>
    %c0_105 = arith.constant 0 : index
    %c0_106 = arith.constant 0 : index
    %136 = vector.load %arg5[%c0_105, %c0_106] : memref<24x1xf32, #tpu.memory_space<vmem>>, vector<24x1xf32>
    %137 = vector.broadcast %136 : vector<24x1xf32> to vector<24x32xf32>
    %138 = arith.addf %135, %137 : vector<24x32xf32>
    %139 = vector.extract_strided_slice %138 {offsets = [0, 0], sizes = [8, 32], strides = [1, 1]} : vector<24x32xf32> to vector<8x32xf32>
    %140 = vector.extract_strided_slice %138 {offsets = [8, 0], sizes = [8, 32], strides = [1, 1]} : vector<24x32xf32> to vector<8x32xf32>
    %141 = arith.addf %139, %140 : vector<8x32xf32>
    %142 = vector.extract_strided_slice %138 {offsets = [16, 0], sizes = [8, 32], strides = [1, 1]} : vector<24x32xf32> to vector<8x32xf32>
    %143 = arith.addf %141, %142 : vector<8x32xf32>
    %c0_107 = arith.constant 0 : index
    %c0_108 = arith.constant 0 : index
    %144 = vector.load %arg13[%c0_107, %c0_108] : memref<32x128xf32, #tpu.memory_space<vmem>>, vector<32x128xf32>
    %cst_109 = arith.constant dense<0.000000e+00> : vector<8x128xf32>
    %145 = tpu.matmul %143, %144, %cst_109 {dimension_numbers = #tpu.dot_dimension_numbers<[1], [0], [0], [1], [0, 0, 1, 1], [], []>} : vector<8x32xf32>, vector<32x128xf32>, vector<8x128xf32> -> vector<8x128xf32>
    %c0_110 = arith.constant 0 : index
    %c0_111 = arith.constant 0 : index
    %146 = vector.load %arg14[%c0_110, %c0_111] : memref<1x128xf32, #tpu.memory_space<vmem>>, vector<1x128xf32>
    %cst_112 = arith.constant 3.000000e+00 : f32
    %147 = vector.broadcast %cst_112 : f32 to vector<1x128xf32>
    %148 = arith.mulf %147, %146 : vector<1x128xf32>
    %149 = vector.broadcast %148 : vector<1x128xf32> to vector<8x128xf32>
    %150 = arith.addf %145, %149 : vector<8x128xf32>
    %c0_113 = arith.constant 0 : index
    %c0_114 = arith.constant 0 : index
    %151 = vector.load %arg15[%c0_113, %c0_114] : memref<8x128xf32, #tpu.memory_space<vmem>>, vector<8x128xf32>
    tpu.vector_store %arg15[%c0_113, %c0_114], %150 {strides = array<i32>} : memref<8x128xf32, #tpu.memory_space<vmem>>, vector<8x128xf32>,
    return
  }
  func.func @transform_0(%arg0: i32) -> (i32, i32) {
    %c0_i32 = arith.constant 0 : i32
    %c0_i32_0 = arith.constant 0 : i32
    return %arg0, %c0_i32 : i32, i32
  }
  func.func @transform_1(%arg0: i32) -> (i32, i32) {
    %c0_i32 = arith.constant 0 : i32
    %c0_i32_0 = arith.constant 0 : i32
    %c0_i32_1 = arith.constant 0 : i32
    return %c0_i32, %c0_i32_0 : i32, i32
  }
  func.func @transform_2(%arg0: i32) -> (i32, i32) {
    %c0_i32 = arith.constant 0 : i32
    %c0_i32_0 = arith.constant 0 : i32
    %c0_i32_1 = arith.constant 0 : i32
    return %c0_i32, %c0_i32_0 : i32, i32
  }
  func.func @transform_3(%arg0: i32) -> (i32, i32) {
    %c0_i32 = arith.constant 0 : i32
    %c0_i32_0 = arith.constant 0 : i32
    %c0_i32_1 = arith.constant 0 : i32
    return %c0_i32, %c0_i32_0 : i32, i32
  }
  func.func @transform_4(%arg0: i32) -> (i32, i32) {
    %c0_i32 = arith.constant 0 : i32
    %c0_i32_0 = arith.constant 0 : i32
    %c0_i32_1 = arith.constant 0 : i32
    return %c0_i32, %c0_i32_0 : i32, i32
  }
  func.func @transform_5(%arg0: i32) -> (i32, i32) {
    %c0_i32 = arith.constant 0 : i32
    %c0_i32_0 = arith.constant 0 : i32
    %c0_i32_1 = arith.constant 0 : i32
    return %c0_i32, %c0_i32_0 : i32, i32
  }
  func.func @transform_6(%arg0: i32) -> (i32, i32, i32) {
    %c0_i32 = arith.constant 0 : i32
    %c0_i32_0 = arith.constant 0 : i32
    %c0_i32_1 = arith.constant 0 : i32
    %c0_i32_2 = arith.constant 0 : i32
    return %c0_i32, %c0_i32_0, %c0_i32_1 : i32, i32, i32
  }
  func.func @transform_7(%arg0: i32) -> (i32, i32, i32) {
    %c0_i32 = arith.constant 0 : i32
    %c0_i32_0 = arith.constant 0 : i32
    %c0_i32_1 = arith.constant 0 : i32
    %c0_i32_2 = arith.constant 0 : i32
    return %c0_i32, %c0_i32_0, %c0_i32_1 : i32, i32, i32
  }
  func.func @transform_8(%arg0: i32) -> (i32, i32, i32) {
    %c0_i32 = arith.constant 0 : i32
    %c0_i32_0 = arith.constant 0 : i32
    %c0_i32_1 = arith.constant 0 : i32
    %c0_i32_2 = arith.constant 0 : i32
    return %c0_i32, %c0_i32_0, %c0_i32_1 : i32, i32, i32
  }
  func.func @transform_9(%arg0: i32) -> (i32, i32, i32) {
    %c0_i32 = arith.constant 0 : i32
    %c0_i32_0 = arith.constant 0 : i32
    %c0_i32_1 = arith.constant 0 : i32
    %c0_i32_2 = arith.constant 0 : i32
    return %c0_i32, %c0_i32_0, %c0_i32_1 : i32, i32, i32
  }
  func.func @transform_10(%arg0: i32) -> (i32, i32, i32) {
    %c0_i32 = arith.constant 0 : i32
    %c0_i32_0 = arith.constant 0 : i32
    %c0_i32_1 = arith.constant 0 : i32
    %c0_i32_2 = arith.constant 0 : i32
    return %c0_i32, %c0_i32_0, %c0_i32_1 : i32, i32, i32
  }
  func.func @transform_11(%arg0: i32) -> (i32, i32, i32) {
    %c0_i32 = arith.constant 0 : i32
    %c0_i32_0 = arith.constant 0 : i32
    %c0_i32_1 = arith.constant 0 : i32
    %c0_i32_2 = arith.constant 0 : i32
    return %c0_i32, %c0_i32_0, %c0_i32_1 : i32, i32, i32
  }
  func.func @transform_12(%arg0: i32) -> (i32, i32) {
    %c0_i32 = arith.constant 0 : i32
    %c0_i32_0 = arith.constant 0 : i32
    %c0_i32_1 = arith.constant 0 : i32
    return %c0_i32, %c0_i32_0 : i32, i32
  }
  func.func @transform_13(%arg0: i32) -> (i32, i32) {
    %c0_i32 = arith.constant 0 : i32
    %c0_i32_0 = arith.constant 0 : i32
    %c0_i32_1 = arith.constant 0 : i32
    return %c0_i32, %c0_i32_0 : i32, i32
  }
  func.func @transform_14(%arg0: i32) -> (i32, i32) {
    %c0_i32 = arith.constant 0 : i32
    %c0_i32_0 = arith.constant 0 : i32
    return %arg0, %c0_i32 : i32, i32
  }
}

</mosaic_0001>

<llo_original>
// kernel: transformer_forward.1
$region0: #{transformer_forward.1}
  #allocation0 [shape = 'u32[]', space=smem, size = 0x4, offset = 0x4, fixed_abs, tag = 'smem constant byte address 0x4 - core index']
  #allocation1 [shape = 'u32[144,128]{1,0:T(1,128)}', space=vmem, size = 0x12000, scoped, tag = 'internal scratch']
  #allocation2 [shape = 'f32[24,32]{1,0:T(8,128)}', space=vmem, size = 0x3000, scoped, tag = 'scratch operand']
  %s0 = inlined_call_operand.vmem [shape: f32[48,16], index: 0, kind: input, shape index: {}]
  %s1 = inlined_call_operand.vmem [shape: f32[16,32], index: 1, kind: input, shape index: {}]
  %s2 = inlined_call_operand.vmem [shape: f32[1,32], index: 2, kind: input, shape index: {}]
  %s3 = inlined_call_operand.vmem [shape: f32[24,1], index: 3, kind: input, shape index: {}]
  %s4 = inlined_call_operand.vmem [shape: f32[24,1], index: 4, kind: input, shape index: {}]
  %s5 = inlined_call_operand.vmem [shape: f32[24,24], index: 5, kind: input, shape index: {}]
  %s6 = inlined_call_operand.vmem [shape: f32[2,32,32], index: 6, kind: input, shape index: {}]
  %s7 = inlined_call_operand.vmem [shape: f32[2,32,32], index: 7, kind: input, shape index: {}]
  %s8 = inlined_call_operand.vmem [shape: f32[2,1,32], index: 8, kind: input, shape index: {}]
  %s9 = inlined_call_operand.vmem [shape: f32[2,1,32], index: 9, kind: input, shape index: {}]
  %s10 = inlined_call_operand.vmem [shape: f32[2,32,32], index: 10, kind: input, shape index: {}]
  %s11 = inlined_call_operand.vmem [shape: f32[2,1,32], index: 11, kind: input, shape index: {}]
  %s12 = inlined_call_operand.vmem [shape: f32[32,128], index: 12, kind: input, shape index: {}]
  %s13 = inlined_call_operand.vmem [shape: f32[1,128], index: 13, kind: input, shape index: {}]
  %s14 = inlined_call_operand.hbm [shape: f32[16,128], index: 14, kind: output, shape index: {}]
  %s15 = sld [smem:[#allocation0]]
  $region89: #{transformer_forward.1} parent=0
    _
  %s17 = ssub.s32 1, %s15
  %s18 = scalar_select 0, %s17, %s15
  $region1: #{transformer_forward.1} parent=0
    #allocation3 [shape = 'u8[8192]{0}', space=vmem, size = 0x2000, scoped, tag = 'output window, operand 0']
    #allocation4 [shape = 's32[2]{0}', space=sflag, size = 0x8, scoped, tag = 'scoped memory for transformer_forward.1']
    %19 = vsyncpa [#allocation4], 0
    %s20 = scalar_lea.sflag [#allocation4], 1
    %21 = vsyncpa %s20, 0
    loop: start=0, step=1, limit=4
    $region2: #{transformer_forward.1} parent=1 // loop_pre_header
      _
    $region3: #{transformer_forward.1} parent=1 // loop_header
      %s23 = sphi 0, %s27
      %p24 = scmp.ge.s32.totalorder %s23, 4
      %s33 = sphi 0, %s35
      %s36 = sphi 0, %s33
      %s37 = sphi 0, %s36
      %s53 = sphi 0, %s37
      %s57 = sphi 0, %s57
      %s59 = sphi 0, %s57
      %s60 = sphi 0, %s59
      %s74 = sphi 0, %s60
      %s78 = sphi 0, %s78
      %s80 = sphi 0, %s78
      %s81 = sphi 0, %s80
      %s95 = sphi 0, %s81
      %s99 = sphi 0, %s99
      %s101 = sphi 0, %s99
      %s102 = sphi 0, %s101
      %s116 = sphi 0, %s102
      %s120 = sphi 0, %s120
      %s122 = sphi 0, %s120
      %s123 = sphi 0, %s122
      %s137 = sphi 0, %s123
      %s141 = sphi 0, %s141
      %s143 = sphi 0, %s141
      %s144 = sphi 0, %s143
      %s158 = sphi 0, %s144
      %s162 = sphi 0, %s162
      %s164 = sphi 0, %s162
      %s165 = sphi 0, %s164
      %s179 = sphi 0, %s165
      %s183 = sphi 0, %s183
      %s185 = sphi 0, %s183
      %s186 = sphi 0, %s185
      %s200 = sphi 0, %s186
      %s204 = sphi 0, %s204
      %s206 = sphi 0, %s204
      %s207 = sphi 0, %s206
      %s221 = sphi 0, %s207
      %s225 = sphi 0, %s225
      %s227 = sphi 0, %s225
      %s228 = sphi 0, %s227
      %s242 = sphi 0, %s228
      %s246 = sphi 0, %s246
      %s248 = sphi 0, %s246
      %s249 = sphi 0, %s248
      %s263 = sphi 0, %s249
      %s267 = sphi 0, %s267
      %s269 = sphi 0, %s267
      %s270 = sphi 0, %s269
      %s284 = sphi 0, %s270
      %s288 = sphi 0, %s288
      %s290 = sphi 0, %s288
      %s291 = sphi 0, %s290
      %s305 = sphi 0, %s291
      %s309 = sphi 0, %s309
      %s311 = sphi 0, %s309
      %s312 = sphi 0, %s311
      %s326 = sphi 0, %s312
      %s332 = sphi 0, %s334
      %s335 = sphi 0, %s332
      %s336 = sphi 0, %s335
      %s352 = sphi 0, %s336
    $region4: #{transformer_forward.1} parent=1 // loop_header_branch
      %26 = sbr.rel (%p24) target = $region8
    $region5: #{transformer_forward.1} parent=1 // loop_body
      %s28 = ssub.s32 %s23, 1
      %s29 = ssub.s32 %s23, 2
      %s30 = sadd.s32 %s23, 1
      %s31 = ssub.s32 %s23, %s30
      %p32 = scmp.eq.s32.totalorder %s31, 0
      %s34 = sadd.s32 %s33, 1
      %s35 = scalar_select %p32, %s33, %s34
      %p38 = pneg %p32
      %p39 = scmp.eq.s32.totalorder %s23, 1
      %p40 = por %p38, %p39
      %p41 = scmp.ne.s32.totalorder %s33, %s36
      %p42 = scmp.eq.s32.totalorder %s23, 0
      %p43 = por %p41, %p42
      %p44 = scmp.ne.s32.totalorder %s33, %s36
      %p45 = scmp.eq.s32.totalorder %s28, 1
      %p46 = por %p44, %p45
      %p47 = scmp.ne.s32.totalorder %s36, %s37
      %p48 = scmp.eq.s32.totalorder %s28, 0
      %p49 = por %p47, %p48
      %p50 = scmp.ne.s32.totalorder %s36, %s37
      %p51 = scmp.eq.s32.totalorder %s29, 1
      %p52 = por %p50, %p51
      %p54 = scmp.ne.s32.totalorder %s37, %s53
      %p55 = scmp.eq.s32.totalorder %s29, 0
      %p56 = por %p54, %p55
      %s58 = sadd.s32 %s57, 1
      %p61 = scmp.eq.s32.totalorder %s23, 1
      %p62 = scmp.ne.s32.totalorder %s57, %s59
      %p63 = scmp.eq.s32.totalorder %s23, 0
      %p64 = por %p62, %p63
      %p65 = scmp.ne.s32.totalorder %s57, %s59
      %p66 = scmp.eq.s32.totalorder %s28, 1
      %p67 = por %p65, %p66
      %p68 = scmp.ne.s32.totalorder %s59, %s60
      %p69 = scmp.eq.s32.totalorder %s28, 0
      %p70 = por %p68, %p69
      %p71 = scmp.ne.s32.totalorder %s59, %s60
      %p72 = scmp.eq.s32.totalorder %s29, 1
      %p73 = por %p71, %p72
      %p75 = scmp.ne.s32.totalorder %s60, %s74
      %p76 = scmp.eq.s32.totalorder %s29, 0
      %p77 = por %p75, %p76
      %s79 = sadd.s32 %s78, 1
      %p82 = scmp.eq.s32.totalorder %s23, 1
      %p83 = scmp.ne.s32.totalorder %s78, %s80
      %p84 = scmp.eq.s32.totalorder %s23, 0
      %p85 = por %p83, %p84
      %p86 = scmp.ne.s32.totalorder %s78, %s80
      %p87 = scmp.eq.s32.totalorder %s28, 1
      %p88 = por %p86, %p87
      %p89 = scmp.ne.s32.totalorder %s80, %s81
      %p90 = scmp.eq.s32.totalorder %s28, 0
      %p91 = por %p89, %p90
      %p92 = scmp.ne.s32.totalorder %s80, %s81
      %p93 = scmp.eq.s32.totalorder %s29, 1
      %p94 = por %p92, %p93
      %p96 = scmp.ne.s32.totalorder %s81, %s95
      %p97 = scmp.eq.s32.totalorder %s29, 0
      %p98 = por %p96, %p97
      %s100 = sadd.s32 %s99, 1
      %p103 = scmp.eq.s32.totalorder %s23, 1
      %p104 = scmp.ne.s32.totalorder %s99, %s101
      %p105 = scmp.eq.s32.totalorder %s23, 0
      %p106 = por %p104, %p105
      %p107 = scmp.ne.s32.totalorder %s99, %s101
      %p108 = scmp.eq.s32.totalorder %s28, 1
      %p109 = por %p107, %p108
      %p110 = scmp.ne.s32.totalorder %s101, %s102
      %p111 = scmp.eq.s32.totalorder %s28, 0
      %p112 = por %p110, %p111
      %p113 = scmp.ne.s32.totalorder %s101, %s102
      %p114 = scmp.eq.s32.totalorder %s29, 1
      %p115 = por %p113, %p114
      %p117 = scmp.ne.s32.totalorder %s102, %s116
      %p118 = scmp.eq.s32.totalorder %s29, 0
      %p119 = por %p117, %p118
      %s121 = sadd.s32 %s120, 1
      %p124 = scmp.eq.s32.totalorder %s23, 1
      %p125 = scmp.ne.s32.totalorder %s120, %s122
      %p126 = scmp.eq.s32.totalorder %s23, 0
      %p127 = por %p125, %p126
      %p128 = scmp.ne.s32.totalorder %s120, %s122
      %p129 = scmp.eq.s32.totalorder %s28, 1
      %p130 = por %p128, %p129
      %p131 = scmp.ne.s32.totalorder %s122, %s123
      %p132 = scmp.eq.s32.totalorder %s28, 0
      %p133 = por %p131, %p132
      %p134 = scmp.ne.s32.totalorder %s122, %s123
      %p135 = scmp.eq.s32.totalorder %s29, 1
      %p136 = por %p134, %p135
      %p138 = scmp.ne.s32.totalorder %s123, %s137
      %p139 = scmp.eq.s32.totalorder %s29, 0
      %p140 = por %p138, %p139
      %s142 = sadd.s32 %s141, 1
      %p145 = scmp.eq.s32.totalorder %s23, 1
      %p146 = scmp.ne.s32.totalorder %s141, %s143
      %p147 = scmp.eq.s32.totalorder %s23, 0
      %p148 = por %p146, %p147
      %p149 = scmp.ne.s32.totalorder %s141, %s143
      %p150 = scmp.eq.s32.totalorder %s28, 1
      %p151 = por %p149, %p150
      %p152 = scmp.ne.s32.totalorder %s143, %s144
      %p153 = scmp.eq.s32.totalorder %s28, 0
      %p154 = por %p152, %p153
      %p155 = scmp.ne.s32.totalorder %s143, %s144
      %p156 = scmp.eq.s32.totalorder %s29, 1
      %p157 = por %p155, %p156
      %p159 = scmp.ne.s32.totalorder %s144, %s158
      %p160 = scmp.eq.s32.totalorder %s29, 0
      %p161 = por %p159, %p160
      %s163 = sadd.s32 %s162, 1
      %p166 = scmp.eq.s32.totalorder %s23, 1
      %p167 = scmp.ne.s32.totalorder %s162, %s164
      %p168 = scmp.eq.s32.totalorder %s23, 0
      %p169 = por %p167, %p168
      %p170 = scmp.ne.s32.totalorder %s162, %s164
      %p171 = scmp.eq.s32.totalorder %s28, 1
      %p172 = por %p170, %p171
      %p173 = scmp.ne.s32.totalorder %s164, %s165
      %p174 = scmp.eq.s32.totalorder %s28, 0
      %p175 = por %p173, %p174
      %p176 = scmp.ne.s32.totalorder %s164, %s165
      %p177 = scmp.eq.s32.totalorder %s29, 1
      %p178 = por %p176, %p177
      %p180 = scmp.ne.s32.totalorder %s165, %s179
      %p181 = scmp.eq.s32.totalorder %s29, 0
      %p182 = por %p180, %p181
      %s184 = sadd.s32 %s183, 1
      %p187 = scmp.eq.s32.totalorder %s23, 1
      %p188 = scmp.ne.s32.totalorder %s183, %s185
      %p189 = scmp.eq.s32.totalorder %s23, 0
      %p190 = por %p188, %p189
      %p191 = scmp.ne.s32.totalorder %s183, %s185
      %p192 = scmp.eq.s32.totalorder %s28, 1
      %p193 = por %p191, %p192
      %p194 = scmp.ne.s32.totalorder %s185, %s186
      %p195 = scmp.eq.s32.totalorder %s28, 0
      %p196 = por %p194, %p195
      %p197 = scmp.ne.s32.totalorder %s185, %s186
      %p198 = scmp.eq.s32.totalorder %s29, 1
      %p199 = por %p197, %p198
      %p201 = scmp.ne.s32.totalorder %s186, %s200
      %p202 = scmp.eq.s32.totalorder %s29, 0
      %p203 = por %p201, %p202
      %s205 = sadd.s32 %s204, 1
      %p208 = scmp.eq.s32.totalorder %s23, 1
      %p209 = scmp.ne.s32.totalorder %s204, %s206
      %p210 = scmp.eq.s32.totalorder %s23, 0
      %p211 = por %p209, %p210
      %p212 = scmp.ne.s32.totalorder %s204, %s206
      %p213 = scmp.eq.s32.totalorder %s28, 1
      %p214 = por %p212, %p213
      %p215 = scmp.ne.s32.totalorder %s206, %s207
      %p216 = scmp.eq.s32.totalorder %s28, 0
      %p217 = por %p215, %p216
      %p218 = scmp.ne.s32.totalorder %s206, %s207
      %p219 = scmp.eq.s32.totalorder %s29, 1
      %p220 = por %p218, %p219
      %p222 = scmp.ne.s32.totalorder %s207, %s221
      %p223 = scmp.eq.s32.totalorder %s29, 0
      %p224 = por %p222, %p223
      %s226 = sadd.s32 %s225, 1
      %p229 = scmp.eq.s32.totalorder %s23, 1
      %p230 = scmp.ne.s32.totalorder %s225, %s227
      %p231 = scmp.eq.s32.totalorder %s23, 0
      %p232 = por %p230, %p231
      %p233 = scmp.ne.s32.totalorder %s225, %s227
      %p234 = scmp.eq.s32.totalorder %s28, 1
      %p235 = por %p233, %p234
      %p236 = scmp.ne.s32.totalorder %s227, %s228
      %p237 = scmp.eq.s32.totalorder %s28, 0
      %p238 = por %p236, %p237
      %p239 = scmp.ne.s32.totalorder %s227, %s228
      %p240 = scmp.eq.s32.totalorder %s29, 1
      %p241 = por %p239, %p240
      %p243 = scmp.ne.s32.totalorder %s228, %s242
      %p244 = scmp.eq.s32.totalorder %s29, 0
      %p245 = por %p243, %p244
      %s247 = sadd.s32 %s246, 1
      %p250 = scmp.eq.s32.totalorder %s23, 1
      %p251 = scmp.ne.s32.totalorder %s246, %s248
      %p252 = scmp.eq.s32.totalorder %s23, 0
      %p253 = por %p251, %p252
      %p254 = scmp.ne.s32.totalorder %s246, %s248
      %p255 = scmp.eq.s32.totalorder %s28, 1
      %p256 = por %p254, %p255
      %p257 = scmp.ne.s32.totalorder %s248, %s249
      %p258 = scmp.eq.s32.totalorder %s28, 0
      %p259 = por %p257, %p258
      %p260 = scmp.ne.s32.totalorder %s248, %s249
      %p261 = scmp.eq.s32.totalorder %s29, 1
      %p262 = por %p260, %p261
      %p264 = scmp.ne.s32.totalorder %s249, %s263
      %p265 = scmp.eq.s32.totalorder %s29, 0
      %p266 = por %p264, %p265
      %s268 = sadd.s32 %s267, 1
      %p271 = scmp.eq.s32.totalorder %s23, 1
      %p272 = scmp.ne.s32.totalorder %s267, %s269
      %p273 = scmp.eq.s32.totalorder %s23, 0
      %p274 = por %p272, %p273
      %p275 = scmp.ne.s32.totalorder %s267, %s269
      %p276 = scmp.eq.s32.totalorder %s28, 1
      %p277 = por %p275, %p276
      %p278 = scmp.ne.s32.totalorder %s269, %s270
      %p279 = scmp.eq.s32.totalorder %s28, 0
      %p280 = por %p278, %p279
      %p281 = scmp.ne.s32.totalorder %s269, %s270
      %p282 = scmp.eq.s32.totalorder %s29, 1
      %p283 = por %p281, %p282
      %p285 = scmp.ne.s32.totalorder %s270, %s284
      %p286 = scmp.eq.s32.totalorder %s29, 0
      %p287 = por %p285, %p286
      %s289 = sadd.s32 %s288, 1
      %p292 = scmp.eq.s32.totalorder %s23, 1
      %p293 = scmp.ne.s32.totalorder %s288, %s290
      %p294 = scmp.eq.s32.totalorder %s23, 0
      %p295 = por %p293, %p294
      %p296 = scmp.ne.s32.totalorder %s288, %s290
      %p297 = scmp.eq.s32.totalorder %s28, 1
      %p298 = por %p296, %p297
      %p299 = scmp.ne.s32.totalorder %s290, %s291
      %p300 = scmp.eq.s32.totalorder %s28, 0
      %p301 = por %p299, %p300
      %p302 = scmp.ne.s32.totalorder %s290, %s291
      %p303 = scmp.eq.s32.totalorder %s29, 1
      %p304 = por %p302, %p303
      %p306 = scmp.ne.s32.totalorder %s291, %s305
      %p307 = scmp.eq.s32.totalorder %s29, 0
      %p308 = por %p306, %p307
      %s310 = sadd.s32 %s309, 1
      %p313 = scmp.eq.s32.totalorder %s23, 1
      %p314 = scmp.ne.s32.totalorder %s309, %s311
      %p315 = scmp.eq.s32.totalorder %s23, 0
      %p316 = por %p314, %p315
      %p317 = scmp.ne.s32.totalorder %s309, %s311
      %p318 = scmp.eq.s32.totalorder %s28, 1
      %p319 = por %p317, %p318
      %p320 = scmp.ne.s32.totalorder %s311, %s312
      %p321 = scmp.eq.s32.totalorder %s28, 0
      %p322 = por %p320, %p321
      %p323 = scmp.ne.s32.totalorder %s311, %s312
      %p324 = scmp.eq.s32.totalorder %s29, 1
      %p325 = por %p323, %p324
      %p327 = scmp.ne.s32.totalorder %s312, %s326
      %p328 = scmp.eq.s32.totalorder %s29, 0
      %p329 = por %p327, %p328
      %s330 = ssub.s32 %s23, %s30
      %p331 = scmp.eq.s32.totalorder %s330, 0
      %s333 = sadd.s32 %s332, 1
      %s334 = scalar_select %p331, %s332, %s333
      %p337 = pneg %p331
      %p338 = scmp.eq.s32.totalorder %s23, 1
      %p339 = por %p337, %p338
      %p340 = scmp.ne.s32.totalorder %s332, %s335
      %p341 = scmp.eq.s32.totalorder %s23, 0
      %p342 = por %p340, %p341
      %p343 = scmp.ne.s32.totalorder %s332, %s335
      %p344 = scmp.eq.s32.totalorder %s28, 1
      %p345 = por %p343, %p344
      %p346 = scmp.ne.s32.totalorder %s335, %s336
      %p347 = scmp.eq.s32.totalorder %s28, 0
      %p348 = por %p346, %p347
      %p349 = scmp.ne.s32.totalorder %s335, %s336
      %p350 = scmp.eq.s32.totalorder %s29, 1
      %p351 = por %p349, %p350
      %p353 = scmp.ne.s32.totalorder %s336, %s352
      %p354 = scmp.eq.s32.totalorder %s29, 0
      %p355 = por %p353, %p354
      %p356 = scmp.le.s32.totalorder 1, %s23
      %p357 = scmp.lt.s32.totalorder %s23, 3
      %p358 = pnand %p356, %p357
      %p359 = pneg %p358
      // Predicated region
      $region9: #{transformer_forward.1} parent=5 // pred_check
        _
      $region10: #{transformer_forward.1} parent=5 // pred_check_branch
        %361 = sbr.rel (%p358) target = $region12
      $region11: #{transformer_forward.1} parent=5 // pred_region
        %s362 = ssub.s32 %s23, 1
        // Predicated region
        $region13: #{transformer_forward.1} parent=11 // pred_check
          %p363 = pneg %p70
        $region14: #{transformer_forward.1} parent=11 // pred_check_branch
          %365 = sbr.rel (%p363) target = $region16
        $region15: #{transformer_forward.1} parent=11 // pred_region
          _
        $region16: #{transformer_forward.1} parent=11 // pred_fallthru
          _
        // Predicated region
        $region17: #{transformer_forward.1} parent=11 // pred_check
          %p366 = pneg %p91
        $region18: #{transformer_forward.1} parent=11 // pred_check_branch
          %368 = sbr.rel (%p366) target = $region20
        $region19: #{transformer_forward.1} parent=11 // pred_region
          _
        $region20: #{transformer_forward.1} parent=11 // pred_fallthru
          _
        // Predicated region
        $region21: #{transformer_forward.1} parent=11 // pred_check
          %p369 = pneg %p112
        $region22: #{transformer_forward.1} parent=11 // pred_check_branch
          %371 = sbr.rel (%p369) target = $region24
        $region23: #{transformer_forward.1} parent=11 // pred_region
          _
        $region24: #{transformer_forward.1} parent=11 // pred_fallthru
          _
        // Predicated region
        $region25: #{transformer_forward.1} parent=11 // pred_check
          %p372 = pneg %p133
        $region26: #{transformer_forward.1} parent=11 // pred_check_branch
          %374 = sbr.rel (%p372) target = $region28
        $region27: #{transformer_forward.1} parent=11 // pred_region
          _
        $region28: #{transformer_forward.1} parent=11 // pred_fallthru
          _
        // Predicated region
        $region29: #{transformer_forward.1} parent=11 // pred_check
          %p375 = pneg %p154
        $region30: #{transformer_forward.1} parent=11 // pred_check_branch
          %377 = sbr.rel (%p375) target = $region32
        $region31: #{transformer_forward.1} parent=11 // pred_region
          _
        $region32: #{transformer_forward.1} parent=11 // pred_fallthru
          _
        // Predicated region
        $region33: #{transformer_forward.1} parent=11 // pred_check
          %p378 = pneg %p175
        $region34: #{transformer_forward.1} parent=11 // pred_check_branch
          %380 = sbr.rel (%p378) target = $region36
        $region35: #{transformer_forward.1} parent=11 // pred_region
          _
        $region36: #{transformer_forward.1} parent=11 // pred_fallthru
          _
        // Predicated region
        $region37: #{transformer_forward.1} parent=11 // pred_check
          %p381 = pneg %p196
        $region38: #{transformer_forward.1} parent=11 // pred_check_branch
          %383 = sbr.rel (%p381) target = $region40
        $region39: #{transformer_forward.1} parent=11 // pred_region
          _
        $region40: #{transformer_forward.1} parent=11 // pred_fallthru
          _
        // Predicated region
        $region41: #{transformer_forward.1} parent=11 // pred_check
          %p384 = pneg %p217
        $region42: #{transformer_forward.1} parent=11 // pred_check_branch
          %386 = sbr.rel (%p384) target = $region44
        $region43: #{transformer_forward.1} parent=11 // pred_region
          _
        $region44: #{transformer_forward.1} parent=11 // pred_fallthru
          _
        // Predicated region
        $region45: #{transformer_forward.1} parent=11 // pred_check
          %p387 = pneg %p238
        $region46: #{transformer_forward.1} parent=11 // pred_check_branch
          %389 = sbr.rel (%p387) target = $region48
        $region47: #{transformer_forward.1} parent=11 // pred_region
          _
        $region48: #{transformer_forward.1} parent=11 // pred_fallthru
          _
        // Predicated region
        $region49: #{transformer_forward.1} parent=11 // pred_check
          %p390 = pneg %p259
        $region50: #{transformer_forward.1} parent=11 // pred_check_branch
          %392 = sbr.rel (%p390) target = $region52
        $region51: #{transformer_forward.1} parent=11 // pred_region
          _
        $region52: #{transformer_forward.1} parent=11 // pred_fallthru
          _
        // Predicated region
        $region53: #{transformer_forward.1} parent=11 // pred_check
          %p393 = pneg %p280
        $region54: #{transformer_forward.1} parent=11 // pred_check_branch
          %395 = sbr.rel (%p393) target = $region56
        $region55: #{transformer_forward.1} parent=11 // pred_region
          _
        $region56: #{transformer_forward.1} parent=11 // pred_fallthru
          _
        // Predicated region
        $region57: #{transformer_forward.1} parent=11 // pred_check
          %p396 = pneg %p301
        $region58: #{transformer_forward.1} parent=11 // pred_check_branch
          %398 = sbr.rel (%p396) target = $region60
        $region59: #{transformer_forward.1} parent=11 // pred_region
          _
        $region60: #{transformer_forward.1} parent=11 // pred_fallthru
          _
        // Predicated region
        $region61: #{transformer_forward.1} parent=11 // pred_check
          %p399 = pneg %p322
        $region62: #{transformer_forward.1} parent=11 // pred_check_branch
          %401 = sbr.rel (%p399) target = $region64
        $region63: #{transformer_forward.1} parent=11 // pred_region
          _
        $region64: #{transformer_forward.1} parent=11 // pred_fallthru
          _
      $region12: #{transformer_forward.1} parent=5 // pred_fallthru
        _
      %p402 = scmp.lt.s32.totalorder %s23, 2
      // Predicated region
      $region65: #{transformer_forward.1} parent=5 // pred_check
        %p403 = pneg %p402
      $region66: #{transformer_forward.1} parent=5 // pred_check_branch
        %405 = sbr.rel (%p403) target = $region68
      $region67: #{transformer_forward.1} parent=5 // pred_region
        // Predicated region
        $region69: #{transformer_forward.1} parent=67 // pred_check
          %p406 = pneg %p43
        $region70: #{transformer_forward.1} parent=67 // pred_check_branch
          %408 = sbr.rel (%p406) target = $region72
        $region71: #{transformer_forward.1} parent=67 // pred_region
          %s409 = smul.u32 3, %s23
          %p410 = scmp.lt.s32.totalorder %s409, 5
          %s411 = scalar_select %p410, %s409, 5
          %s412 = smul.addr %s411, 8
          %s413 = scalar_lea.vmem %s0, %s412
          %s414 = smul.u32 3, %s23
        $region72: #{transformer_forward.1} parent=67 // pred_fallthru
          _
      $region68: #{transformer_forward.1} parent=5 // pred_fallthru
        _
      %p415 = scmp.le.s32.totalorder 1, %s23
      %p416 = scmp.lt.s32.totalorder %s23, 3
      %p417 = pnand %p415, %p416
      %p418 = pneg %p417
      // Predicated region
      $region73: #{transformer_forward.1} parent=5 // pred_check
        _
      $region74: #{transformer_forward.1} parent=5 // pred_check_branch
        %420 = sbr.rel (%p417) target = $region76
      $region75: #{transformer_forward.1} parent=5 // pred_region
        %s421 = ssub.s32 %s23, 1
        %s422 = smul.u32 3, %s28
        %p423 = scmp.lt.s32.totalorder %s422, 5
        %s424 = scalar_select %p423, %s422, 5
        %s425 = smul.addr %s424, 8
        %s426 = scalar_lea.vmem %s0, %s425
        %p427 = pneg %p49
        %p428 = pneg %p46
        %p429 = pneg %p70
        %p430 = pneg %p67
        %p431 = pneg %p91
        %p432 = pneg %p88
        %p433 = pneg %p112
        %p434 = pneg %p109
        %p435 = pneg %p133
        %p436 = pneg %p130
        %p437 = pneg %p154
        %p438 = pneg %p151
        %p439 = pneg %p175
        %p440 = pneg %p172
        %p441 = pneg %p196
        %p442 = pneg %p193
        %p443 = pneg %p217
        %p444 = pneg %p214
        %p445 = pneg %p238
        %p446 = pneg %p235
        %p447 = pneg %p259
        %p448 = pneg %p256
        %p449 = pneg %p280
        %p450 = pneg %p277
        %p451 = pneg %p301
        %p452 = pneg %p298
        %p453 = pneg %p322
        %p454 = pneg %p319
        %p455 = pneg %p348
        %p456 = pneg %p345
        %s457 = sand.u32 %s335, 1
        %s458 = scalar_lea.sflag [#allocation4], %s457
        %s459 = sand.u32 %s335, 1
        %s460 = smul.addr %s459, 8
        %s461 = scalar_lea.vmem [#allocation3], %s460
        %s462 = smul.u32 3, %s28
        %p463 = scmp.lt.s32.totalorder %s462, 5
        %s464 = scalar_select %p463, %s462, 5
        %s465 = smul.addr %s464, 8
        %s466 = scalar_lea.vmem %s0, %s465
        %s467 = smul.u32 3, %s28
        %v468 = vld [vmem:[%s466] sm:$0xff]
        %v469 = vld [vmem:[%s466 + $0x8] sm:$0xff]
        %v470 = vld [vmem:[%s466 + $0x10] sm:$0xff]
        %v471 = vld [vmem:[%s1] sm:$0xff]
        %v472 = vld [vmem:[%s1 + $0x8] sm:$0xff]
        %v473 = vld [vmem:[%s2] sm:$0x1]
        %v475 = vlaneseq
        %v476 = vshrl.u32 %v475, 7
        %v477 = vsub.s32 0, %v476
        %v478 = vrot.slane %v473, %v477
        %vm480 = vcmask 130048
        %v482 = vsel %vm480, %v468, 0
        %v485 = vsel %vm480, %v469, 0
        %v488 = vsel %vm480, %v470, 0
        %490 = vmatprep.subr.mxu0 0.0
        %491 = vmatpush1.msra.mxu0 0.0
        %492 = vmatprep.subr.mxu0 0.0
        %493 = vmatpush1.msra.mxu0 0.0
        %494 = vmatprep.subr.mxu0 0.0
        %495 = vmatpush1.msra.mxu0 0.0
        %496 = vmatprep.subr.mxu0 0.0
        %497 = vmatpush1.msra.mxu0 0.0
        %498 = vmatprep.subr.mxu0 0.0
        %499 = vmatpush1.msra.mxu0 0.0
        %500 = vmatprep.subr.mxu0 0.0
        %501 = vmatpush1.msra.mxu0 0.0
        %502 = vmatprep.subr.mxu0 0.0
        %503 = vmatpush1.msra.mxu0 0.0
        %504 = vmatprep.subr.mxu0 0.0
        %505 = vmatpush1.msra.mxu0 0.0
        %506 = vmatprep.subr.mxu0 0.0
        %507 = vmatpush1.msra.mxu0 0.0
        %508 = vmatprep.subr.mxu0 0.0
        %509 = vmatpush1.msra.mxu0 0.0
        %510 = vmatprep.subr.mxu0 0.0
        %511 = vmatpush1.msra.mxu0 0.0
        %512 = vmatprep.subr.mxu0 0.0
        %513 = vmatpush1.msra.mxu0 0.0
        %514 = vmatprep.subr.mxu0 0.0
        %515 = vmatpush1.msra.mxu0 0.0
        %516 = vmatprep.subr.mxu0 0.0
        %517 = vmatpush1.msra.mxu0 0.0
        %518 = vmatprep.subr.mxu0 0.0
        %519 = vmatpush1.msra.mxu0 %v472
        %520 = vmatprep.subr.mxu0 0.0
        %521 = vmatpush1.msra.mxu0 %v471
        %522 = vmatprep.subr.mxu0 0.0
        %523 = vmatpush2.msra.mxu0 0.0
        %524 = vmatprep.subr.mxu0 0.0
        %525 = vmatpush2.msra.mxu0 0.0
        %526 = vmatprep.subr.mxu0 0.0
        %527 = vmatpush2.msra.mxu0 0.0
        %528 = vmatprep.subr.mxu0 0.0
        %529 = vmatpush2.msra.mxu0 0.0
        %530 = vmatprep.subr.mxu0 0.0
        %531 = vmatpush2.msra.mxu0 0.0
        %532 = vmatprep.subr.mxu0 0.0
        %533 = vmatpush2.msra.mxu0 0.0
        %534 = vmatprep.subr.mxu0 0.0
        %535 = vmatpush2.msra.mxu0 0.0
        %536 = vmatprep.subr.mxu0 0.0
        %537 = vmatpush2.msra.mxu0 0.0
        %538 = vmatprep.subr.mxu0 0.0
        %539 = vmatpush2.msra.mxu0 0.0
        %540 = vmatprep.subr.mxu0 0.0
        %541 = vmatpush2.msra.mxu0 0.0
        %542 = vmatprep.subr.mxu0 0.0
        %543 = vmatpush2.msra.mxu0 0.0
        %544 = vmatprep.subr.mxu0 0.0
        %545 = vmatpush2.msra.mxu0 0.0
        %546 = vmatprep.subr.mxu0 0.0
        %547 = vmatpush2.msra.mxu0 0.0
        %548 = vmatprep.subr.mxu0 0.0
        %549 = vmatpush2.msra.mxu0 0.0
        %550 = vmatprep.subr.mxu0 0.0
        %551 = vmatpush2.msra.mxu0 0.0
        %552 = vmatprep.subr.mxu0 0.0
        %553 = vmatpush2.msra.mxu0 0.0
        %554 = vmatprep.mubr.f32.mxu0 0.0
        %555 = vmatmul.mubr.f32.gmra.mxu0 %v482
        %v556 = vpop.f32.mrf.mxu0
        %v557 = vadd.f32 %v478, %v556
        %v558 = vpop.f32.mrf.mxu0
        %559 = vmatprep.mubr.f32.mxu0 0.0
        %560 = vmatmul.mubr.f32.gmra.mxu0 %v485
        %v561 = vpop.f32.mrf.mxu0
        %v562 = vadd.f32 %v478, %v561
        %v563 = vpop.f32.mrf.mxu0
        %564 = vmatprep.mubr.f32.mxu0 0.0
        %565 = vmatmul.mubr.f32.gmra.mxu0 %v488
        %v566 = vpop.f32.mrf.mxu0
        %v567 = vadd.f32 %v478, %v566
        %v568 = vpop.f32.mrf.mxu0
        %569 = vdwg.mxu0
        %v570 = vld [vmem:[%s5] sm:$0xff]
        %v571 = vld [vmem:[%s5 + $0x8] sm:$0xff]
        %v572 = vld [vmem:[%s5 + $0x10] sm:$0xff]
        %vm573 = vcmask 195584
        %v575 = vsel %vm573, %v570, 0
        %v578 = vsel %vm573, %v571, 0
        %v581 = vsel %vm573, %v572, 0
        %583 = vmatprep.subr.mxu0 0.0
        %584 = vmatpush1.msra.mxu0 0.0
        %585 = vmatprep.subr.mxu0 0.0
        %586 = vmatpush1.msra.mxu0 0.0
        %587 = vmatprep.subr.mxu0 0.0
        %588 = vmatpush1.msra.mxu0 0.0
        %589 = vmatprep.subr.mxu0 0.0
        %590 = vmatpush1.msra.mxu0 0.0
        %591 = vmatprep.subr.mxu0 0.0
        %592 = vmatpush1.msra.mxu0 0.0
        %593 = vmatprep.subr.mxu0 0.0
        %594 = vmatpush1.msra.mxu0 0.0
        %595 = vmatprep.subr.mxu0 0.0
        %596 = vmatpush1.msra.mxu0 0.0
        %597 = vmatprep.subr.mxu0 0.0
        %598 = vmatpush1.msra.mxu0 0.0
        %599 = vmatprep.subr.mxu0 0.0
        %600 = vmatpush1.msra.mxu0 0.0
        %601 = vmatprep.subr.mxu0 0.0
        %602 = vmatpush1.msra.mxu0 0.0
        %603 = vmatprep.subr.mxu0 0.0
        %604 = vmatpush1.msra.mxu0 0.0
        %605 = vmatprep.subr.mxu0 0.0
        %606 = vmatpush1.msra.mxu0 0.0
        %607 = vmatprep.subr.mxu0 0.0
        %608 = vmatpush1.msra.mxu0 0.0
        %609 = vmatprep.subr.mxu0 0.0
        %610 = vmatpush1.msra.mxu0 %v567
        %611 = vmatprep.subr.mxu0 0.0
        %612 = vmatpush1.msra.mxu0 %v562
        %613 = vmatprep.subr.mxu0 0.0
        %614 = vmatpush1.msra.mxu0 %v557
        %615 = vmatprep.subr.mxu0 0.0
        %616 = vmatpush2.msra.mxu0 0.0
        %617 = vmatprep.subr.mxu0 0.0
        %618 = vmatpush2.msra.mxu0 0.0
        %619 = vmatprep.subr.mxu0 0.0
        %620 = vmatpush2.msra.mxu0 0.0
        %621 = vmatprep.subr.mxu0 0.0
        %622 = vmatpush2.msra.mxu0 0.0
        %623 = vmatprep.subr.mxu0 0.0
        %624 = vmatpush2.msra.mxu0 0.0
        %625 = vmatprep.subr.mxu0 0.0
        %626 = vmatpush2.msra.mxu0 0.0
        %627 = vmatprep.subr.mxu0 0.0
        %628 = vmatpush2.msra.mxu0 0.0
        %629 = vmatprep.subr.mxu0 0.0
        %630 = vmatpush2.msra.mxu0 0.0
        %631 = vmatprep.subr.mxu0 0.0
        %632 = vmatpush2.msra.mxu0 0.0
        %633 = vmatprep.subr.mxu0 0.0
        %634 = vmatpush2.msra.mxu0 0.0
        %635 = vmatprep.subr.mxu0 0.0
        %636 = vmatpush2.msra.mxu0 0.0
        %637 = vmatprep.subr.mxu0 0.0
        %638 = vmatpush2.msra.mxu0 0.0
        %639 = vmatprep.subr.mxu0 0.0
        %640 = vmatpush2.msra.mxu0 0.0
        %641 = vmatprep.subr.mxu0 0.0
        %642 = vmatpush2.msra.mxu0 0.0
        %643 = vmatprep.subr.mxu0 0.0
        %644 = vmatpush2.msra.mxu0 0.0
        %645 = vmatprep.subr.mxu0 0.0
        %646 = vmatpush2.msra.mxu0 0.0
        %647 = vmatprep.mubr.f32.mxu0 0.0
        %648 = vmatmul.mubr.f32.gmra.mxu0 %v575
        %v649 = vpop.f32.mrf.mxu0
        %v650 = vadd.f32 0.0, %v649
        %v651 = vpop.f32.mrf.mxu0
        %652 = vmatprep.mubr.f32.mxu0 0.0
        %653 = vmatmul.mubr.f32.gmra.mxu0 %v578
        %v654 = vpop.f32.mrf.mxu0
        %v655 = vadd.f32 0.0, %v654
        %v656 = vpop.f32.mrf.mxu0
        %657 = vmatprep.mubr.f32.mxu0 0.0
        %658 = vmatmul.mubr.f32.gmra.mxu0 %v581
        %v659 = vpop.f32.mrf.mxu0
        %v660 = vadd.f32 0.0, %v659
        %v661 = vpop.f32.mrf.mxu0
        %662 = vdwg.mxu0
        %vm663 = vcmask 261120
        %v664 = vsel %vm663, %v650, 0.0
        %665 = vadd.xlane.f32.xlu0 %v664
        %v666 = vpop.xlane.xlu0 %665
        %v667 = vsel %vm663, %v655, 0.0
        %668 = vadd.xlane.f32.xlu0 %v667
        %v669 = vpop.xlane.xlu0 %668
        %v670 = vsel %vm663, %v660, 0.0
        %671 = vadd.xlane.f32.xlu0 %v670
        %v672 = vpop.xlane.xlu0 %671
        %v673 = vsub.f32 %v557, %v666
        %v674 = vsub.f32 %v562, %v669
        %v675 = vsub.f32 %v567, %v672
        %v676 = vmul.f32 %v673, %v673
        %v677 = vmul.f32 %v674, %v674
        %v678 = vmul.f32 %v675, %v675
        %679 = vmatprep.subr.mxu0 0.0
        %680 = vmatpush1.msra.mxu0 0.0
        %681 = vmatprep.subr.mxu0 0.0
        %682 = vmatpush1.msra.mxu0 0.0
        %683 = vmatprep.subr.mxu0 0.0
        %684 = vmatpush1.msra.mxu0 0.0
        %685 = vmatprep.subr.mxu0 0.0
        %686 = vmatpush1.msra.mxu0 0.0
        %687 = vmatprep.subr.mxu0 0.0
        %688 = vmatpush1.msra.mxu0 0.0
        %689 = vmatprep.subr.mxu0 0.0
        %690 = vmatpush1.msra.mxu0 0.0
        %691 = vmatprep.subr.mxu0 0.0
        %692 = vmatpush1.msra.mxu0 0.0
        %693 = vmatprep.subr.mxu0 0.0
        %694 = vmatpush1.msra.mxu0 0.0
        %695 = vmatprep.subr.mxu0 0.0
        %696 = vmatpush1.msra.mxu0 0.0
        %697 = vmatprep.subr.mxu0 0.0
        %698 = vmatpush1.msra.mxu0 0.0
        %699 = vmatprep.subr.mxu0 0.0
        %700 = vmatpush1.msra.mxu0 0.0
        %701 = vmatprep.subr.mxu0 0.0
        %702 = vmatpush1.msra.mxu0 0.0
        %703 = vmatprep.subr.mxu0 0.0
        %704 = vmatpush1.msra.mxu0 0.0
        %705 = vmatprep.subr.mxu0 0.0
        %706 = vmatpush1.msra.mxu0 %v678
        %707 = vmatprep.subr.mxu0 0.0
        %708 = vmatpush1.msra.mxu0 %v677
        %709 = vmatprep.subr.mxu0 0.0
        %710 = vmatpush1.msra.mxu0 %v676
        %711 = vmatprep.subr.mxu0 0.0
        %712 = vmatpush2.msra.mxu0 0.0
        %713 = vmatprep.subr.mxu0 0.0
        %714 = vmatpush2.msra.mxu0 0.0
        %715 = vmatprep.subr.mxu0 0.0
        %716 = vmatpush2.msra.mxu0 0.0
        %717 = vmatprep.subr.mxu0 0.0
        %718 = vmatpush2.msra.mxu0 0.0
        %719 = vmatprep.subr.mxu0 0.0
        %720 = vmatpush2.msra.mxu0 0.0
        %721 = vmatprep.subr.mxu0 0.0
        %722 = vmatpush2.msra.mxu0 0.0
        %723 = vmatprep.subr.mxu0 0.0
        %724 = vmatpush2.msra.mxu0 0.0
        %725 = vmatprep.subr.mxu0 0.0
        %726 = vmatpush2.msra.mxu0 0.0
        %727 = vmatprep.subr.mxu0 0.0
        %728 = vmatpush2.msra.mxu0 0.0
        %729 = vmatprep.subr.mxu0 0.0
        %730 = vmatpush2.msra.mxu0 0.0
        %731 = vmatprep.subr.mxu0 0.0
        %732 = vmatpush2.msra.mxu0 0.0
        %733 = vmatprep.subr.mxu0 0.0
        %734 = vmatpush2.msra.mxu0 0.0
        %735 = vmatprep.subr.mxu0 0.0
        %736 = vmatpush2.msra.mxu0 0.0
        %737 = vmatprep.subr.mxu0 0.0
        %738 = vmatpush2.msra.mxu0 0.0
        %739 = vmatprep.subr.mxu0 0.0
        %740 = vmatpush2.msra.mxu0 0.0
        %741 = vmatprep.subr.mxu0 0.0
        %742 = vmatpush2.msra.mxu0 0.0
        %743 = vmatprep.mubr.f32.mxu0 0.0
        %744 = vmatmul.mubr.f32.gmra.mxu0 %v575
        %v745 = vpop.f32.mrf.mxu0
        %v746 = vadd.f32 0.0, %v745
        %v747 = vpop.f32.mrf.mxu0
        %748 = vmatprep.mubr.f32.mxu0 0.0
        %749 = vmatmul.mubr.f32.gmra.mxu0 %v578
        %v750 = vpop.f32.mrf.mxu0
        %v751 = vadd.f32 0.0, %v750
        %v752 = vpop.f32.mrf.mxu0
        %753 = vmatprep.mubr.f32.mxu0 0.0
        %754 = vmatmul.mubr.f32.gmra.mxu0 %v581
        %v755 = vpop.f32.mrf.mxu0
        %v756 = vadd.f32 0.0, %v755
        %v757 = vpop.f32.mrf.mxu0
        %758 = vdwg.mxu0
        %v759 = vsel %vm663, %v746, 0.0
        %760 = vadd.xlane.f32.xlu0 %v759
        %v761 = vpop.xlane.xlu0 %760
        %v762 = vsel %vm663, %v751, 0.0
        %763 = vadd.xlane.f32.xlu0 %v762
        %v764 = vpop.xlane.xlu0 %763
        %v765 = vsel %vm663, %v756, 0.0
        %766 = vadd.xlane.f32.xlu0 %v765
        %v767 = vpop.xlane.xlu0 %766
        %v768 = vld [vmem:[%s3] sm:$0xff]
        %v769 = vld [vmem:[%s3 + $0x8] sm:$0xff]
        %v770 = vld [vmem:[%s3 + $0x10] sm:$0xff]
        %v771 = vadd.f32 %v761, 1e-05
        %v772 = vadd.f32 %v764, 1e-05
        %v773 = vadd.f32 %v767, 1e-05
        %v774 = vrsqrt.pop %v771
        %v775 = vrsqrt.pop %v772
        %v776 = vrsqrt.pop %v773
        %v777 = vmul.f32 %v768, %v774
        %v778 = vmul.f32 %v769, %v775
        %v779 = vmul.f32 %v770, %v776
        %781 = vset.pattern.permute.xlu0 0
        %782 = vperm.xlu0 %781, %v777
        %v783 = vpop.permute.xlu0 %782
        %786 = vset.pattern.permute.xlu0 0
        %787 = vperm.xlu0 %786, %v778
        %v788 = vpop.permute.xlu0 %787
        %791 = vset.pattern.permute.xlu0 0
        %792 = vperm.xlu0 %791, %v779
        %v793 = vpop.permute.xlu0 %792
        %v795 = vmul.f32 %v673, %v783
        %v796 = vmul.f32 %v674, %v788
        %v797 = vmul.f32 %v675, %v793
        %v798 = vld [vmem:[%s4] sm:$0xff]
        %v799 = vld [vmem:[%s4 + $0x8] sm:$0xff]
        %v800 = vld [vmem:[%s4 + $0x10] sm:$0xff]
        %802 = vset.pattern.permute.xlu0 0
        %803 = vperm.xlu0 %802, %v798
        %v804 = vpop.permute.xlu0 %803
        %807 = vset.pattern.permute.xlu0 0
        %808 = vperm.xlu0 %807, %v799
        %v809 = vpop.permute.xlu0 %808
        %812 = vset.pattern.permute.xlu0 0
        %813 = vperm.xlu0 %812, %v800
        %v814 = vpop.permute.xlu0 %813
        %v816 = vadd.f32 %v795, %v804
        %v817 = vadd.f32 %v796, %v809
        %v818 = vadd.f32 %v797, %v814
        %v819 = vld [vmem:[%s6] sm:$0xff]
        %v820 = vld [vmem:[%s6 + $0x8] sm:$0xff]
        %v821 = vld [vmem:[%s6 + $0x10] sm:$0xff]
        %v822 = vld [vmem:[%s6 + $0x18] sm:$0xff]
        %v823 = vld [vmem:[%s8] sm:$0x1]
        %v824 = vld [vmem:[%s9] sm:$0x1]
        %v825 = vadd.f32 %v823, %v824
        %v827 = vlaneseq
        %v828 = vshrl.u32 %v827, 7
        %v829 = vsub.s32 0, %v828
        %v830 = vrot.slane %v825, %v829
        %v833 = vsel %vm663, %v816, 0
        %v836 = vsel %vm663, %v817, 0
        %v839 = vsel %vm663, %v818, 0
        %841 = vmatprep.subr.mxu0 0.0
        %842 = vmatpush1.msra.mxu0 0.0
        %843 = vmatprep.subr.mxu0 0.0
        %844 = vmatpush1.msra.mxu0 0.0
        %845 = vmatprep.subr.mxu0 0.0
        %846 = vmatpush1.msra.mxu0 0.0
        %847 = vmatprep.subr.mxu0 0.0
        %848 = vmatpush1.msra.mxu0 0.0
        %849 = vmatprep.subr.mxu0 0.0
        %850 = vmatpush1.msra.mxu0 0.0
        %851 = vmatprep.subr.mxu0 0.0
        %852 = vmatpush1.msra.mxu0 0.0
        %853 = vmatprep.subr.mxu0 0.0
        %854 = vmatpush1.msra.mxu0 0.0
        %855 = vmatprep.subr.mxu0 0.0
        %856 = vmatpush1.msra.mxu0 0.0
        %857 = vmatprep.subr.mxu0 0.0
        %858 = vmatpush1.msra.mxu0 0.0
        %859 = vmatprep.subr.mxu0 0.0
        %860 = vmatpush1.msra.mxu0 0.0
        %861 = vmatprep.subr.mxu0 0.0
        %862 = vmatpush1.msra.mxu0 0.0
        %863 = vmatprep.subr.mxu0 0.0
        %864 = vmatpush1.msra.mxu0 0.0
        %865 = vmatprep.subr.mxu0 0.0
        %866 = vmatpush1.msra.mxu0 %v822
        %867 = vmatprep.subr.mxu0 0.0
        %868 = vmatpush1.msra.mxu0 %v821
        %869 = vmatprep.subr.mxu0 0.0
        %870 = vmatpush1.msra.mxu0 %v820
        %871 = vmatprep.subr.mxu0 0.0
        %872 = vmatpush1.msra.mxu0 %v819
        %873 = vmatprep.subr.mxu0 0.0
        %874 = vmatpush2.msra.mxu0 0.0
        %875 = vmatprep.subr.mxu0 0.0
        %876 = vmatpush2.msra.mxu0 0.0
        %877 = vmatprep.subr.mxu0 0.0
        %878 = vmatpush2.msra.mxu0 0.0
        %879 = vmatprep.subr.mxu0 0.0
        %880 = vmatpush2.msra.mxu0 0.0
        %881 = vmatprep.subr.mxu0 0.0
        %882 = vmatpush2.msra.mxu0 0.0
        %883 = vmatprep.subr.mxu0 0.0
        %884 = vmatpush2.msra.mxu0 0.0
        %885 = vmatprep.subr.mxu0 0.0
        %886 = vmatpush2.msra.mxu0 0.0
        %887 = vmatprep.subr.mxu0 0.0
        %888 = vmatpush2.msra.mxu0 0.0
        %889 = vmatprep.subr.mxu0 0.0
        %890 = vmatpush2.msra.mxu0 0.0
        %891 = vmatprep.subr.mxu0 0.0
        %892 = vmatpush2.msra.mxu0 0.0
        %893 = vmatprep.subr.mxu0 0.0
        %894 = vmatpush2.msra.mxu0 0.0
        %895 = vmatprep.subr.mxu0 0.0
        %896 = vmatpush2.msra.mxu0 0.0
        %897 = vmatprep.subr.mxu0 0.0
        %898 = vmatpush2.msra.mxu0 0.0
        %899 = vmatprep.subr.mxu0 0.0
        %900 = vmatpush2.msra.mxu0 0.0
        %901 = vmatprep.subr.mxu0 0.0
        %902 = vmatpush2.msra.mxu0 0.0
        %903 = vmatprep.subr.mxu0 0.0
        %904 = vmatpush2.msra.mxu0 0.0
        %905 = vmatprep.mubr.f32.mxu0 0.0
        %906 = vmatmul.mubr.f32.gmra.mxu0 %v833
        %v907 = vpop.f32.mrf.mxu0
        %v908 = vadd.f32 %v830, %v907
        %v909 = vpop.f32.mrf.mxu0
        %910 = vmatprep.mubr.f32.mxu0 0.0
        %911 = vmatmul.mubr.f32.gmra.mxu0 %v836
        %v912 = vpop.f32.mrf.mxu0
        %v913 = vadd.f32 %v830, %v912
        %v914 = vpop.f32.mrf.mxu0
        %915 = vmatprep.mubr.f32.mxu0 0.0
        %916 = vmatmul.mubr.f32.gmra.mxu0 %v839
        %v917 = vpop.f32.mrf.mxu0
        %v918 = vadd.f32 %v830, %v917
        %v919 = vpop.f32.mrf.mxu0
        %920 = vdwg.mxu0
        %v921 = vtanh.pop %v908
        %922 = vst.msk [vmem:[#allocation2] sm:$0xff] %vm663, %v921
        %v923 = vld [vmem:[%s7] sm:$0xff]
        %v924 = vld [vmem:[%s7 + $0x8] sm:$0xff]
        %v925 = vld [vmem:[%s7 + $0x10] sm:$0xff]
        %v926 = vld [vmem:[%s7 + $0x18] sm:$0xff]
        %v928 = vsel %vm663, %v921, 0
        %930 = vmatprep.subr.mxu0 0.0
        %931 = vmatpush1.msra.mxu0 0.0
        %932 = vmatprep.subr.mxu0 0.0
        %933 = vmatpush1.msra.mxu0 0.0
        %934 = vmatprep.subr.mxu0 0.0
        %935 = vmatpush1.msra.mxu0 0.0
        %936 = vmatprep.subr.mxu0 0.0
        %937 = vmatpush1.msra.mxu0 0.0
        %938 = vmatprep.subr.mxu0 0.0
        %939 = vmatpush1.msra.mxu0 0.0
        %940 = vmatprep.subr.mxu0 0.0
        %941 = vmatpush1.msra.mxu0 0.0
        %942 = vmatprep.subr.mxu0 0.0
        %943 = vmatpush1.msra.mxu0 0.0
        %944 = vmatprep.subr.mxu0 0.0
        %945 = vmatpush1.msra.mxu0 0.0
        %946 = vmatprep.subr.mxu0 0.0
        %947 = vmatpush1.msra.mxu0 0.0
        %948 = vmatprep.subr.mxu0 0.0
        %949 = vmatpush1.msra.mxu0 0.0
        %950 = vmatprep.subr.mxu0 0.0
        %951 = vmatpush1.msra.mxu0 0.0
        %952 = vmatprep.subr.mxu0 0.0
        %953 = vmatpush1.msra.mxu0 0.0
        %954 = vmatprep.subr.mxu0 0.0
        %955 = vmatpush1.msra.mxu0 %v926
        %956 = vmatprep.subr.mxu0 0.0
        %957 = vmatpush1.msra.mxu0 %v925
        %958 = vmatprep.subr.mxu0 0.0
        %959 = vmatpush1.msra.mxu0 %v924
        %960 = vmatprep.subr.mxu0 0.0
        %961 = vmatpush1.msra.mxu0 %v923
        %962 = vmatprep.subr.mxu0 0.0
        %963 = vmatpush2.msra.mxu0 0.0
        %964 = vmatprep.subr.mxu0 0.0
        %965 = vmatpush2.msra.mxu0 0.0
        %966 = vmatprep.subr.mxu0 0.0
        %967 = vmatpush2.msra.mxu0 0.0
        %968 = vmatprep.subr.mxu0 0.0
        %969 = vmatpush2.msra.mxu0 0.0
        %970 = vmatprep.subr.mxu0 0.0
        %971 = vmatpush2.msra.mxu0 0.0
        %972 = vmatprep.subr.mxu0 0.0
        %973 = vmatpush2.msra.mxu0 0.0
        %974 = vmatprep.subr.mxu0 0.0
        %975 = vmatpush2.msra.mxu0 0.0
        %976 = vmatprep.subr.mxu0 0.0
        %977 = vmatpush2.msra.mxu0 0.0
        %978 = vmatprep.subr.mxu0 0.0
        %979 = vmatpush2.msra.mxu0 0.0
        %980 = vmatprep.subr.mxu0 0.0
        %981 = vmatpush2.msra.mxu0 0.0
        %982 = vmatprep.subr.mxu0 0.0
        %983 = vmatpush2.msra.mxu0 0.0
        %984 = vmatprep.subr.mxu0 0.0
        %985 = vmatpush2.msra.mxu0 0.0
        %986 = vmatprep.subr.mxu0 0.0
        %987 = vmatpush2.msra.mxu0 0.0
        %988 = vmatprep.subr.mxu0 0.0
        %989 = vmatpush2.msra.mxu0 0.0
        %990 = vmatprep.subr.mxu0 0.0
        %991 = vmatpush2.msra.mxu0 0.0
        %992 = vmatprep.subr.mxu0 0.0
        %993 = vmatpush2.msra.mxu0 0.0
        %994 = vmatprep.mubr.f32.mxu0 0.0
        %995 = vmatmul.mubr.f32.gmra.mxu0 %v928
        %v996 = vpop.f32.mrf.mxu0
        %v997 = vadd.f32 0.0, %v996
        %v998 = vpop.f32.mrf.mxu0
        %999 = vdwg.mxu0
        %v1000 = vadd.f32 %v913, %v997
        %v1001 = vtanh.pop %v1000
        %1002 = vst.msk [vmem:[#allocation2 + $0x8] sm:$0xff] %vm663, %v1001
        %v1003 = vld [vmem:[%s7] sm:$0xff]
        %v1004 = vld [vmem:[%s7 + $0x8] sm:$0xff]
        %v1005 = vld [vmem:[%s7 + $0x10] sm:$0xff]
        %v1006 = vld [vmem:[%s7 + $0x18] sm:$0xff]
        %v1008 = vsel %vm663, %v1001, 0
        %1010 = vmatprep.subr.mxu0 0.0
        %1011 = vmatpush1.msra.mxu0 0.0
        %1012 = vmatprep.subr.mxu0 0.0
        %1013 = vmatpush1.msra.mxu0 0.0
        %1014 = vmatprep.subr.mxu0 0.0
        %1015 = vmatpush1.msra.mxu0 0.0
        %1016 = vmatprep.subr.mxu0 0.0
        %1017 = vmatpush1.msra.mxu0 0.0
        %1018 = vmatprep.subr.mxu0 0.0
        %1019 = vmatpush1.msra.mxu0 0.0
        %1020 = vmatprep.subr.mxu0 0.0
        %1021 = vmatpush1.msra.mxu0 0.0
        %1022 = vmatprep.subr.mxu0 0.0
        %1023 = vmatpush1.msra.mxu0 0.0
        %1024 = vmatprep.subr.mxu0 0.0
        %1025 = vmatpush1.msra.mxu0 0.0
        %1026 = vmatprep.subr.mxu0 0.0
        %1027 = vmatpush1.msra.mxu0 0.0
        %1028 = vmatprep.subr.mxu0 0.0
        %1029 = vmatpush1.msra.mxu0 0.0
        %1030 = vmatprep.subr.mxu0 0.0
        %1031 = vmatpush1.msra.mxu0 0.0
        %1032 = vmatprep.subr.mxu0 0.0
        %1033 = vmatpush1.msra.mxu0 0.0
        %1034 = vmatprep.subr.mxu0 0.0
        %1035 = vmatpush1.msra.mxu0 %v1006
        %1036 = vmatprep.subr.mxu0 0.0
        %1037 = vmatpush1.msra.mxu0 %v1005
        %1038 = vmatprep.subr.mxu0 0.0
        %1039 = vmatpush1.msra.mxu0 %v1004
        %1040 = vmatprep.subr.mxu0 0.0
        %1041 = vmatpush1.msra.mxu0 %v1003
        %1042 = vmatprep.subr.mxu0 0.0
        %1043 = vmatpush2.msra.mxu0 0.0
        %1044 = vmatprep.subr.mxu0 0.0
        %1045 = vmatpush2.msra.mxu0 0.0
        %1046 = vmatprep.subr.mxu0 0.0
        %1047 = vmatpush2.msra.mxu0 0.0
        %1048 = vmatprep.subr.mxu0 0.0
        %1049 = vmatpush2.msra.mxu0 0.0
        %1050 = vmatprep.subr.mxu0 0.0
        %1051 = vmatpush2.msra.mxu0 0.0
        %1052 = vmatprep.subr.mxu0 0.0
        %1053 = vmatpush2.msra.mxu0 0.0
        %1054 = vmatprep.subr.mxu0 0.0
        %1055 = vmatpush2.msra.mxu0 0.0
        %1056 = vmatprep.subr.mxu0 0.0
        %1057 = vmatpush2.msra.mxu0 0.0
        %1058 = vmatprep.subr.mxu0 0.0
        %1059 = vmatpush2.msra.mxu0 0.0
        %1060 = vmatprep.subr.mxu0 0.0
        %1061 = vmatpush2.msra.mxu0 0.0
        %1062 = vmatprep.subr.mxu0 0.0
        %1063 = vmatpush2.msra.mxu0 0.0
        %1064 = vmatprep.subr.mxu0 0.0
        %1065 = vmatpush2.msra.mxu0 0.0
        %1066 = vmatprep.subr.mxu0 0.0
        %1067 = vmatpush2.msra.mxu0 0.0
        %1068 = vmatprep.subr.mxu0 0.0
        %1069 = vmatpush2.msra.mxu0 0.0
        %1070 = vmatprep.subr.mxu0 0.0
        %1071 = vmatpush2.msra.mxu0 0.0
        %1072 = vmatprep.subr.mxu0 0.0
        %1073 = vmatpush2.msra.mxu0 0.0
        %1074 = vmatprep.mubr.f32.mxu0 0.0
        %1075 = vmatmul.mubr.f32.gmra.mxu0 %v1008
        %v1076 = vpop.f32.mrf.mxu0
        %v1077 = vadd.f32 0.0, %v1076
        %v1078 = vpop.f32.mrf.mxu0
        %1079 = vdwg.mxu0
        %v1080 = vadd.f32 %v918, %v1077
        %v1081 = vtanh.pop %v1080
        %1082 = vst.msk [vmem:[#allocation2 + $0x10] sm:$0xff] %vm663, %v1081
        %v1083 = vld [vmem:[#allocation2] sm:$0xff]
        %v1084 = vld [vmem:[#allocation2 + $0x8] sm:$0xff]
        %v1085 = vld [vmem:[#allocation2 + $0x10] sm:$0xff]
        %v1086 = vld [vmem:[%s10] sm:$0xff]
        %v1087 = vld [vmem:[%s10 + $0x8] sm:$0xff]
        %v1088 = vld [vmem:[%s10 + $0x10] sm:$0xff]
        %v1089 = vld [vmem:[%s10 + $0x18] sm:$0xff]
        %v1090 = vld [vmem:[%s11] sm:$0x1]
        %v1092 = vlaneseq
        %v1093 = vshrl.u32 %v1092, 7
        %v1094 = vsub.s32 0, %v1093
        %v1095 = vrot.slane %v1090, %v1094
        %v1098 = vsel %vm663, %v1083, 0
        %v1101 = vsel %vm663, %v1084, 0
        %v1104 = vsel %vm663, %v1085, 0
        %1106 = vmatprep.subr.mxu0 0.0
        %1107 = vmatpush1.msra.mxu0 0.0
        %1108 = vmatprep.subr.mxu0 0.0
        %1109 = vmatpush1.msra.mxu0 0.0
        %1110 = vmatprep.subr.mxu0 0.0
        %1111 = vmatpush1.msra.mxu0 0.0
        %1112 = vmatprep.subr.mxu0 0.0
        %1113 = vmatpush1.msra.mxu0 0.0
        %1114 = vmatprep.subr.mxu0 0.0
        %1115 = vmatpush1.msra.mxu0 0.0
        %1116 = vmatprep.subr.mxu0 0.0
        %1117 = vmatpush1.msra.mxu0 0.0
        %1118 = vmatprep.subr.mxu0 0.0
        %1119 = vmatpush1.msra.mxu0 0.0
        %1120 = vmatprep.subr.mxu0 0.0
        %1121 = vmatpush1.msra.mxu0 0.0
        %1122 = vmatprep.subr.mxu0 0.0
        %1123 = vmatpush1.msra.mxu0 0.0
        %1124 = vmatprep.subr.mxu0 0.0
        %1125 = vmatpush1.msra.mxu0 0.0
        %1126 = vmatprep.subr.mxu0 0.0
        %1127 = vmatpush1.msra.mxu0 0.0
        %1128 = vmatprep.subr.mxu0 0.0
        %1129 = vmatpush1.msra.mxu0 0.0
        %1130 = vmatprep.subr.mxu0 0.0
        %1131 = vmatpush1.msra.mxu0 %v1089
        %1132 = vmatprep.subr.mxu0 0.0
        %1133 = vmatpush1.msra.mxu0 %v1088
        %1134 = vmatprep.subr.mxu0 0.0
        %1135 = vmatpush1.msra.mxu0 %v1087
        %1136 = vmatprep.subr.mxu0 0.0
        %1137 = vmatpush1.msra.mxu0 %v1086
        %1138 = vmatprep.subr.mxu0 0.0
        %1139 = vmatpush2.msra.mxu0 0.0
        %1140 = vmatprep.subr.mxu0 0.0
        %1141 = vmatpush2.msra.mxu0 0.0
        %1142 = vmatprep.subr.mxu0 0.0
        %1143 = vmatpush2.msra.mxu0 0.0
        %1144 = vmatprep.subr.mxu0 0.0
        %1145 = vmatpush2.msra.mxu0 0.0
        %1146 = vmatprep.subr.mxu0 0.0
        %1147 = vmatpush2.msra.mxu0 0.0
        %1148 = vmatprep.subr.mxu0 0.0
        %1149 = vmatpush2.msra.mxu0 0.0
        %1150 = vmatprep.subr.mxu0 0.0
        %1151 = vmatpush2.msra.mxu0 0.0
        %1152 = vmatprep.subr.mxu0 0.0
        %1153 = vmatpush2.msra.mxu0 0.0
        %1154 = vmatprep.subr.mxu0 0.0
        %1155 = vmatpush2.msra.mxu0 0.0
        %1156 = vmatprep.subr.mxu0 0.0
        %1157 = vmatpush2.msra.mxu0 0.0
        %1158 = vmatprep.subr.mxu0 0.0
        %1159 = vmatpush2.msra.mxu0 0.0
        %1160 = vmatprep.subr.mxu0 0.0
        %1161 = vmatpush2.msra.mxu0 0.0
        %1162 = vmatprep.subr.mxu0 0.0
        %1163 = vmatpush2.msra.mxu0 0.0
        %1164 = vmatprep.subr.mxu0 0.0
        %1165 = vmatpush2.msra.mxu0 0.0
        %1166 = vmatprep.subr.mxu0 0.0
        %1167 = vmatpush2.msra.mxu0 0.0
        %1168 = vmatprep.subr.mxu0 0.0
        %1169 = vmatpush2.msra.mxu0 0.0
        %1170 = vmatprep.mubr.f32.mxu0 0.0
        %1171 = vmatmul.mubr.f32.gmra.mxu0 %v1098
        %v1172 = vpop.f32.mrf.mxu0
        %v1173 = vadd.f32 %v1095, %v1172
        %v1174 = vpop.f32.mrf.mxu0
        %1175 = vmatprep.mubr.f32.mxu0 0.0
        %1176 = vmatmul.mubr.f32.gmra.mxu0 %v1101
        %v1177 = vpop.f32.mrf.mxu0
        %v1178 = vadd.f32 %v1095, %v1177
        %v1179 = vpop.f32.mrf.mxu0
        %1180 = vmatprep.mubr.f32.mxu0 0.0
        %1181 = vmatmul.mubr.f32.gmra.mxu0 %v1104
        %v1182 = vpop.f32.mrf.mxu0
        %v1183 = vadd.f32 %v1095, %v1182
        %v1184 = vpop.f32.mrf.mxu0
        %1185 = vdwg.mxu0
        %v1186 = vld [vmem:[%s5] sm:$0xff]
        %v1187 = vld [vmem:[%s5 + $0x8] sm:$0xff]
        %v1188 = vld [vmem:[%s5 + $0x10] sm:$0xff]
        %v1190 = vsel %vm573, %v1186, 0
        %v1193 = vsel %vm573, %v1187, 0
        %v1196 = vsel %vm573, %v1188, 0
        %1198 = vmatprep.subr.mxu0 0.0
        %1199 = vmatpush1.msra.mxu0 0.0
        %1200 = vmatprep.subr.mxu0 0.0
        %1201 = vmatpush1.msra.mxu0 0.0
        %1202 = vmatprep.subr.mxu0 0.0
        %1203 = vmatpush1.msra.mxu0 0.0
        %1204 = vmatprep.subr.mxu0 0.0
        %1205 = vmatpush1.msra.mxu0 0.0
        %1206 = vmatprep.subr.mxu0 0.0
        %1207 = vmatpush1.msra.mxu0 0.0
        %1208 = vmatprep.subr.mxu0 0.0
        %1209 = vmatpush1.msra.mxu0 0.0
        %1210 = vmatprep.subr.mxu0 0.0
        %1211 = vmatpush1.msra.mxu0 0.0
        %1212 = vmatprep.subr.mxu0 0.0
        %1213 = vmatpush1.msra.mxu0 0.0
        %1214 = vmatprep.subr.mxu0 0.0
        %1215 = vmatpush1.msra.mxu0 0.0
        %1216 = vmatprep.subr.mxu0 0.0
        %1217 = vmatpush1.msra.mxu0 0.0
        %1218 = vmatprep.subr.mxu0 0.0
        %1219 = vmatpush1.msra.mxu0 0.0
        %1220 = vmatprep.subr.mxu0 0.0
        %1221 = vmatpush1.msra.mxu0 0.0
        %1222 = vmatprep.subr.mxu0 0.0
        %1223 = vmatpush1.msra.mxu0 0.0
        %1224 = vmatprep.subr.mxu0 0.0
        %1225 = vmatpush1.msra.mxu0 %v1183
        %1226 = vmatprep.subr.mxu0 0.0
        %1227 = vmatpush1.msra.mxu0 %v1178
        %1228 = vmatprep.subr.mxu0 0.0
        %1229 = vmatpush1.msra.mxu0 %v1173
        %1230 = vmatprep.subr.mxu0 0.0
        %1231 = vmatpush2.msra.mxu0 0.0
        %1232 = vmatprep.subr.mxu0 0.0
        %1233 = vmatpush2.msra.mxu0 0.0
        %1234 = vmatprep.subr.mxu0 0.0
        %1235 = vmatpush2.msra.mxu0 0.0
        %1236 = vmatprep.subr.mxu0 0.0
        %1237 = vmatpush2.msra.mxu0 0.0
        %1238 = vmatprep.subr.mxu0 0.0
        %1239 = vmatpush2.msra.mxu0 0.0
        %1240 = vmatprep.subr.mxu0 0.0
        %1241 = vmatpush2.msra.mxu0 0.0
        %1242 = vmatprep.subr.mxu0 0.0
        %1243 = vmatpush2.msra.mxu0 0.0
        %1244 = vmatprep.subr.mxu0 0.0
        %1245 = vmatpush2.msra.mxu0 0.0
        %1246 = vmatprep.subr.mxu0 0.0
        %1247 = vmatpush2.msra.mxu0 0.0
        %1248 = vmatprep.subr.mxu0 0.0
        %1249 = vmatpush2.msra.mxu0 0.0
        %1250 = vmatprep.subr.mxu0 0.0
        %1251 = vmatpush2.msra.mxu0 0.0
        %1252 = vmatprep.subr.mxu0 0.0
        %1253 = vmatpush2.msra.mxu0 0.0
        %1254 = vmatprep.subr.mxu0 0.0
        %1255 = vmatpush2.msra.mxu0 0.0
        %1256 = vmatprep.subr.mxu0 0.0
        %1257 = vmatpush2.msra.mxu0 0.0
        %1258 = vmatprep.subr.mxu0 0.0
        %1259 = vmatpush2.msra.mxu0 0.0
        %1260 = vmatprep.subr.mxu0 0.0
        %1261 = vmatpush2.msra.mxu0 0.0
        %1262 = vmatprep.mubr.f32.mxu0 0.0
        %1263 = vmatmul.mubr.f32.gmra.mxu0 %v1190
        %v1264 = vpop.f32.mrf.mxu0
        %v1265 = vadd.f32 0.0, %v1264
        %v1266 = vpop.f32.mrf.mxu0
        %1267 = vmatprep.mubr.f32.mxu0 0.0
        %1268 = vmatmul.mubr.f32.gmra.mxu0 %v1193
        %v1269 = vpop.f32.mrf.mxu0
        %v1270 = vadd.f32 0.0, %v1269
        %v1271 = vpop.f32.mrf.mxu0
        %1272 = vmatprep.mubr.f32.mxu0 0.0
        %1273 = vmatmul.mubr.f32.gmra.mxu0 %v1196
        %v1274 = vpop.f32.mrf.mxu0
        %v1275 = vadd.f32 0.0, %v1274
        %v1276 = vpop.f32.mrf.mxu0
        %1277 = vdwg.mxu0
        %v1278 = vsel %vm663, %v1265, 0.0
        %1279 = vadd.xlane.f32.xlu0 %v1278
        %v1280 = vpop.xlane.xlu0 %1279
        %v1281 = vsel %vm663, %v1270, 0.0
        %1282 = vadd.xlane.f32.xlu0 %v1281
        %v1283 = vpop.xlane.xlu0 %1282
        %v1284 = vsel %vm663, %v1275, 0.0
        %1285 = vadd.xlane.f32.xlu0 %v1284
        %v1286 = vpop.xlane.xlu0 %1285
        %v1287 = vsub.f32 %v1173, %v1280
        %v1288 = vsub.f32 %v1178, %v1283
        %v1289 = vsub.f32 %v1183, %v1286
        %v1290 = vmul.f32 %v1287, %v1287
        %v1291 = vmul.f32 %v1288, %v1288
        %v1292 = vmul.f32 %v1289, %v1289
        %1293 = vmatprep.subr.mxu0 0.0
        %1294 = vmatpush1.msra.mxu0 0.0
        %1295 = vmatprep.subr.mxu0 0.0
        %1296 = vmatpush1.msra.mxu0 0.0
        %1297 = vmatprep.subr.mxu0 0.0
        %1298 = vmatpush1.msra.mxu0 0.0
        %1299 = vmatprep.subr.mxu0 0.0
        %1300 = vmatpush1.msra.mxu0 0.0
        %1301 = vmatprep.subr.mxu0 0.0
        %1302 = vmatpush1.msra.mxu0 0.0
        %1303 = vmatprep.subr.mxu0 0.0
        %1304 = vmatpush1.msra.mxu0 0.0
        %1305 = vmatprep.subr.mxu0 0.0
        %1306 = vmatpush1.msra.mxu0 0.0
        %1307 = vmatprep.subr.mxu0 0.0
        %1308 = vmatpush1.msra.mxu0 0.0
        %1309 = vmatprep.subr.mxu0 0.0
        %1310 = vmatpush1.msra.mxu0 0.0
        %1311 = vmatprep.subr.mxu0 0.0
        %1312 = vmatpush1.msra.mxu0 0.0
        %1313 = vmatprep.subr.mxu0 0.0
        %1314 = vmatpush1.msra.mxu0 0.0
        %1315 = vmatprep.subr.mxu0 0.0
        %1316 = vmatpush1.msra.mxu0 0.0
        %1317 = vmatprep.subr.mxu0 0.0
        %1318 = vmatpush1.msra.mxu0 0.0
        %1319 = vmatprep.subr.mxu0 0.0
        %1320 = vmatpush1.msra.mxu0 %v1292
        %1321 = vmatprep.subr.mxu0 0.0
        %1322 = vmatpush1.msra.mxu0 %v1291
        %1323 = vmatprep.subr.mxu0 0.0
        %1324 = vmatpush1.msra.mxu0 %v1290
        %1325 = vmatprep.subr.mxu0 0.0
        %1326 = vmatpush2.msra.mxu0 0.0
        %1327 = vmatprep.subr.mxu0 0.0
        %1328 = vmatpush2.msra.mxu0 0.0
        %1329 = vmatprep.subr.mxu0 0.0
        %1330 = vmatpush2.msra.mxu0 0.0
        %1331 = vmatprep.subr.mxu0 0.0
        %1332 = vmatpush2.msra.mxu0 0.0
        %1333 = vmatprep.subr.mxu0 0.0
        %1334 = vmatpush2.msra.mxu0 0.0
        %1335 = vmatprep.subr.mxu0 0.0
        %1336 = vmatpush2.msra.mxu0 0.0
        %1337 = vmatprep.subr.mxu0 0.0
        %1338 = vmatpush2.msra.mxu0 0.0
        %1339 = vmatprep.subr.mxu0 0.0
        %1340 = vmatpush2.msra.mxu0 0.0
        %1341 = vmatprep.subr.mxu0 0.0
        %1342 = vmatpush2.msra.mxu0 0.0
        %1343 = vmatprep.subr.mxu0 0.0
        %1344 = vmatpush2.msra.mxu0 0.0
        %1345 = vmatprep.subr.mxu0 0.0
        %1346 = vmatpush2.msra.mxu0 0.0
        %1347 = vmatprep.subr.mxu0 0.0
        %1348 = vmatpush2.msra.mxu0 0.0
        %1349 = vmatprep.subr.mxu0 0.0
        %1350 = vmatpush2.msra.mxu0 0.0
        %1351 = vmatprep.subr.mxu0 0.0
        %1352 = vmatpush2.msra.mxu0 0.0
        %1353 = vmatprep.subr.mxu0 0.0
        %1354 = vmatpush2.msra.mxu0 0.0
        %1355 = vmatprep.subr.mxu0 0.0
        %1356 = vmatpush2.msra.mxu0 0.0
        %1357 = vmatprep.mubr.f32.mxu0 0.0
        %1358 = vmatmul.mubr.f32.gmra.mxu0 %v1190
        %v1359 = vpop.f32.mrf.mxu0
        %v1360 = vadd.f32 0.0, %v1359
        %v1361 = vpop.f32.mrf.mxu0
        %1362 = vmatprep.mubr.f32.mxu0 0.0
        %1363 = vmatmul.mubr.f32.gmra.mxu0 %v1193
        %v1364 = vpop.f32.mrf.mxu0
        %v1365 = vadd.f32 0.0, %v1364
        %v1366 = vpop.f32.mrf.mxu0
        %1367 = vmatprep.mubr.f32.mxu0 0.0
        %1368 = vmatmul.mubr.f32.gmra.mxu0 %v1196
        %v1369 = vpop.f32.mrf.mxu0
        %v1370 = vadd.f32 0.0, %v1369
        %v1371 = vpop.f32.mrf.mxu0
        %1372 = vdwg.mxu0
        %v1373 = vsel %vm663, %v1360, 0.0
        %1374 = vadd.xlane.f32.xlu0 %v1373
        %v1375 = vpop.xlane.xlu0 %1374
        %v1376 = vsel %vm663, %v1365, 0.0
        %1377 = vadd.xlane.f32.xlu0 %v1376
        %v1378 = vpop.xlane.xlu0 %1377
        %v1379 = vsel %vm663, %v1370, 0.0
        %1380 = vadd.xlane.f32.xlu0 %v1379
        %v1381 = vpop.xlane.xlu0 %1380
        %v1382 = vld [vmem:[%s3] sm:$0xff]
        %v1383 = vld [vmem:[%s3 + $0x8] sm:$0xff]
        %v1384 = vld [vmem:[%s3 + $0x10] sm:$0xff]
        %v1385 = vadd.f32 %v1375, 1e-05
        %v1386 = vadd.f32 %v1378, 1e-05
        %v1387 = vadd.f32 %v1381, 1e-05
        %v1388 = vrsqrt.pop %v1385
        %v1389 = vrsqrt.pop %v1386
        %v1390 = vrsqrt.pop %v1387
        %v1391 = vmul.f32 %v1382, %v1388
        %v1392 = vmul.f32 %v1383, %v1389
        %v1393 = vmul.f32 %v1384, %v1390
        %1395 = vset.pattern.permute.xlu0 0
        %1396 = vperm.xlu0 %1395, %v1391
        %v1397 = vpop.permute.xlu0 %1396
        %1400 = vset.pattern.permute.xlu0 0
        %1401 = vperm.xlu0 %1400, %v1392
        %v1402 = vpop.permute.xlu0 %1401
        %1405 = vset.pattern.permute.xlu0 0
        %1406 = vperm.xlu0 %1405, %v1393
        %v1407 = vpop.permute.xlu0 %1406
        %v1409 = vmul.f32 %v1287, %v1397
        %v1410 = vmul.f32 %v1288, %v1402
        %v1411 = vmul.f32 %v1289, %v1407
        %v1412 = vld [vmem:[%s4] sm:$0xff]
        %v1413 = vld [vmem:[%s4 + $0x8] sm:$0xff]
        %v1414 = vld [vmem:[%s4 + $0x10] sm:$0xff]
        %1416 = vset.pattern.permute.xlu0 0
        %1417 = vperm.xlu0 %1416, %v1412
        %v1418 = vpop.permute.xlu0 %1417
        %1421 = vset.pattern.permute.xlu0 0
        %1422 = vperm.xlu0 %1421, %v1413
        %v1423 = vpop.permute.xlu0 %1422
        %1426 = vset.pattern.permute.xlu0 0
        %1427 = vperm.xlu0 %1426, %v1414
        %v1428 = vpop.permute.xlu0 %1427
        %v1430 = vadd.f32 %v1409, %v1418
        %v1431 = vadd.f32 %v1410, %v1423
        %v1432 = vadd.f32 %v1411, %v1428
        %s1433 = scalar_lea.vmem %s6, 32
        %v1434 = vld [vmem:[%s1433] sm:$0xff]
        %v1435 = vld [vmem:[%s1433 + $0x8] sm:$0xff]
        %v1436 = vld [vmem:[%s1433 + $0x10] sm:$0xff]
        %v1437 = vld [vmem:[%s1433 + $0x18] sm:$0xff]
        %s1438 = scalar_lea.vmem %s8, 1
        %v1439 = vld [vmem:[%s1438] sm:$0x1]
        %s1440 = scalar_lea.vmem %s9, 1
        %v1441 = vld [vmem:[%s1440] sm:$0x1]
        %v1442 = vadd.f32 %v1439, %v1441
        %v1444 = vlaneseq
        %v1445 = vshrl.u32 %v1444, 7
        %v1446 = vsub.s32 0, %v1445
        %v1447 = vrot.slane %v1442, %v1446
        %v1450 = vsel %vm663, %v1430, 0
        %v1453 = vsel %vm663, %v1431, 0
        %v1456 = vsel %vm663, %v1432, 0
        %1458 = vmatprep.subr.mxu0 0.0
        %1459 = vmatpush1.msra.mxu0 0.0
        %1460 = vmatprep.subr.mxu0 0.0
        %1461 = vmatpush1.msra.mxu0 0.0
        %1462 = vmatprep.subr.mxu0 0.0
        %1463 = vmatpush1.msra.mxu0 0.0
        %1464 = vmatprep.subr.mxu0 0.0
        %1465 = vmatpush1.msra.mxu0 0.0
        %1466 = vmatprep.subr.mxu0 0.0
        %1467 = vmatpush1.msra.mxu0 0.0
        %1468 = vmatprep.subr.mxu0 0.0
        %1469 = vmatpush1.msra.mxu0 0.0
        %1470 = vmatprep.subr.mxu0 0.0
        %1471 = vmatpush1.msra.mxu0 0.0
        %1472 = vmatprep.subr.mxu0 0.0
        %1473 = vmatpush1.msra.mxu0 0.0
        %1474 = vmatprep.subr.mxu0 0.0
        %1475 = vmatpush1.msra.mxu0 0.0
        %1476 = vmatprep.subr.mxu0 0.0
        %1477 = vmatpush1.msra.mxu0 0.0
        %1478 = vmatprep.subr.mxu0 0.0
        %1479 = vmatpush1.msra.mxu0 0.0
        %1480 = vmatprep.subr.mxu0 0.0
        %1481 = vmatpush1.msra.mxu0 0.0
        %1482 = vmatprep.subr.mxu0 0.0
        %1483 = vmatpush1.msra.mxu0 %v1437
        %1484 = vmatprep.subr.mxu0 0.0
        %1485 = vmatpush1.msra.mxu0 %v1436
        %1486 = vmatprep.subr.mxu0 0.0
        %1487 = vmatpush1.msra.mxu0 %v1435
        %1488 = vmatprep.subr.mxu0 0.0
        %1489 = vmatpush1.msra.mxu0 %v1434
        %1490 = vmatprep.subr.mxu0 0.0
        %1491 = vmatpush2.msra.mxu0 0.0
        %1492 = vmatprep.subr.mxu0 0.0
        %1493 = vmatpush2.msra.mxu0 0.0
        %1494 = vmatprep.subr.mxu0 0.0
        %1495 = vmatpush2.msra.mxu0 0.0
        %1496 = vmatprep.subr.mxu0 0.0
        %1497 = vmatpush2.msra.mxu0 0.0
        %1498 = vmatprep.subr.mxu0 0.0
        %1499 = vmatpush2.msra.mxu0 0.0
        %1500 = vmatprep.subr.mxu0 0.0
        %1501 = vmatpush2.msra.mxu0 0.0
        %1502 = vmatprep.subr.mxu0 0.0
        %1503 = vmatpush2.msra.mxu0 0.0
        %1504 = vmatprep.subr.mxu0 0.0
        %1505 = vmatpush2.msra.mxu0 0.0
        %1506 = vmatprep.subr.mxu0 0.0
        %1507 = vmatpush2.msra.mxu0 0.0
        %1508 = vmatprep.subr.mxu0 0.0
        %1509 = vmatpush2.msra.mxu0 0.0
        %1510 = vmatprep.subr.mxu0 0.0
        %1511 = vmatpush2.msra.mxu0 0.0
        %1512 = vmatprep.subr.mxu0 0.0
        %1513 = vmatpush2.msra.mxu0 0.0
        %1514 = vmatprep.subr.mxu0 0.0
        %1515 = vmatpush2.msra.mxu0 0.0
        %1516 = vmatprep.subr.mxu0 0.0
        %1517 = vmatpush2.msra.mxu0 0.0
        %1518 = vmatprep.subr.mxu0 0.0
        %1519 = vmatpush2.msra.mxu0 0.0
        %1520 = vmatprep.subr.mxu0 0.0
        %1521 = vmatpush2.msra.mxu0 0.0
        %1522 = vmatprep.mubr.f32.mxu0 0.0
        %1523 = vmatmul.mubr.f32.gmra.mxu0 %v1450
        %v1524 = vpop.f32.mrf.mxu0
        %v1525 = vadd.f32 %v1447, %v1524
        %v1526 = vpop.f32.mrf.mxu0
        %1527 = vmatprep.mubr.f32.mxu0 0.0
        %1528 = vmatmul.mubr.f32.gmra.mxu0 %v1453
        %v1529 = vpop.f32.mrf.mxu0
        %v1530 = vadd.f32 %v1447, %v1529
        %v1531 = vpop.f32.mrf.mxu0
        %1532 = vmatprep.mubr.f32.mxu0 0.0
        %1533 = vmatmul.mubr.f32.gmra.mxu0 %v1456
        %v1534 = vpop.f32.mrf.mxu0
        %v1535 = vadd.f32 %v1447, %v1534
        %v1536 = vpop.f32.mrf.mxu0
        %1537 = vdwg.mxu0
        %v1538 = vtanh.pop %v1525
        %1539 = vst.msk [vmem:[#allocation2] sm:$0xff] %vm663, %v1538
        %s1540 = scalar_lea.vmem %s7, 32
        %v1541 = vld [vmem:[%s1540] sm:$0xff]
        %v1542 = vld [vmem:[%s1540 + $0x8] sm:$0xff]
        %v1543 = vld [vmem:[%s1540 + $0x10] sm:$0xff]
        %v1544 = vld [vmem:[%s1540 + $0x18] sm:$0xff]
        %v1546 = vsel %vm663, %v1538, 0
        %1548 = vmatprep.subr.mxu0 0.0
        %1549 = vmatpush1.msra.mxu0 0.0
        %1550 = vmatprep.subr.mxu0 0.0
        %1551 = vmatpush1.msra.mxu0 0.0
        %1552 = vmatprep.subr.mxu0 0.0
        %1553 = vmatpush1.msra.mxu0 0.0
        %1554 = vmatprep.subr.mxu0 0.0
        %1555 = vmatpush1.msra.mxu0 0.0
        %1556 = vmatprep.subr.mxu0 0.0
        %1557 = vmatpush1.msra.mxu0 0.0
        %1558 = vmatprep.subr.mxu0 0.0
        %1559 = vmatpush1.msra.mxu0 0.0
        %1560 = vmatprep.subr.mxu0 0.0
        %1561 = vmatpush1.msra.mxu0 0.0
        %1562 = vmatprep.subr.mxu0 0.0
        %1563 = vmatpush1.msra.mxu0 0.0
        %1564 = vmatprep.subr.mxu0 0.0
        %1565 = vmatpush1.msra.mxu0 0.0
        %1566 = vmatprep.subr.mxu0 0.0
        %1567 = vmatpush1.msra.mxu0 0.0
        %1568 = vmatprep.subr.mxu0 0.0
        %1569 = vmatpush1.msra.mxu0 0.0
        %1570 = vmatprep.subr.mxu0 0.0
        %1571 = vmatpush1.msra.mxu0 0.0
        %1572 = vmatprep.subr.mxu0 0.0
        %1573 = vmatpush1.msra.mxu0 %v1544
        %1574 = vmatprep.subr.mxu0 0.0
        %1575 = vmatpush1.msra.mxu0 %v1543
        %1576 = vmatprep.subr.mxu0 0.0
        %1577 = vmatpush1.msra.mxu0 %v1542
        %1578 = vmatprep.subr.mxu0 0.0
        %1579 = vmatpush1.msra.mxu0 %v1541
        %1580 = vmatprep.subr.mxu0 0.0
        %1581 = vmatpush2.msra.mxu0 0.0
        %1582 = vmatprep.subr.mxu0 0.0
        %1583 = vmatpush2.msra.mxu0 0.0
        %1584 = vmatprep.subr.mxu0 0.0
        %1585 = vmatpush2.msra.mxu0 0.0
        %1586 = vmatprep.subr.mxu0 0.0
        %1587 = vmatpush2.msra.mxu0 0.0
        %1588 = vmatprep.subr.mxu0 0.0
        %1589 = vmatpush2.msra.mxu0 0.0
        %1590 = vmatprep.subr.mxu0 0.0
        %1591 = vmatpush2.msra.mxu0 0.0
        %1592 = vmatprep.subr.mxu0 0.0
        %1593 = vmatpush2.msra.mxu0 0.0
        %1594 = vmatprep.subr.mxu0 0.0
        %1595 = vmatpush2.msra.mxu0 0.0
        %1596 = vmatprep.subr.mxu0 0.0
        %1597 = vmatpush2.msra.mxu0 0.0
        %1598 = vmatprep.subr.mxu0 0.0
        %1599 = vmatpush2.msra.mxu0 0.0
        %1600 = vmatprep.subr.mxu0 0.0
        %1601 = vmatpush2.msra.mxu0 0.0
        %1602 = vmatprep.subr.mxu0 0.0
        %1603 = vmatpush2.msra.mxu0 0.0
        %1604 = vmatprep.subr.mxu0 0.0
        %1605 = vmatpush2.msra.mxu0 0.0
        %1606 = vmatprep.subr.mxu0 0.0
        %1607 = vmatpush2.msra.mxu0 0.0
        %1608 = vmatprep.subr.mxu0 0.0
        %1609 = vmatpush2.msra.mxu0 0.0
        %1610 = vmatprep.subr.mxu0 0.0
        %1611 = vmatpush2.msra.mxu0 0.0
        %1612 = vmatprep.mubr.f32.mxu0 0.0
        %1613 = vmatmul.mubr.f32.gmra.mxu0 %v1546
        %v1614 = vpop.f32.mrf.mxu0
        %v1615 = vadd.f32 0.0, %v1614
        %v1616 = vpop.f32.mrf.mxu0
        %1617 = vdwg.mxu0
        %v1618 = vadd.f32 %v1530, %v1615
        %v1619 = vtanh.pop %v1618
        %1620 = vst.msk [vmem:[#allocation2 + $0x8] sm:$0xff] %vm663, %v1619
        %v1621 = vld [vmem:[%s1540] sm:$0xff]
        %v1622 = vld [vmem:[%s1540 + $0x8] sm:$0xff]
        %v1623 = vld [vmem:[%s1540 + $0x10] sm:$0xff]
        %v1624 = vld [vmem:[%s1540 + $0x18] sm:$0xff]
        %v1626 = vsel %vm663, %v1619, 0
        %1628 = vmatprep.subr.mxu0 0.0
        %1629 = vmatpush1.msra.mxu0 0.0
        %1630 = vmatprep.subr.mxu0 0.0
        %1631 = vmatpush1.msra.mxu0 0.0
        %1632 = vmatprep.subr.mxu0 0.0
        %1633 = vmatpush1.msra.mxu0 0.0
        %1634 = vmatprep.subr.mxu0 0.0
        %1635 = vmatpush1.msra.mxu0 0.0
        %1636 = vmatprep.subr.mxu0 0.0
        %1637 = vmatpush1.msra.mxu0 0.0
        %1638 = vmatprep.subr.mxu0 0.0
        %1639 = vmatpush1.msra.mxu0 0.0
        %1640 = vmatprep.subr.mxu0 0.0
        %1641 = vmatpush1.msra.mxu0 0.0
        %1642 = vmatprep.subr.mxu0 0.0
        %1643 = vmatpush1.msra.mxu0 0.0
        %1644 = vmatprep.subr.mxu0 0.0
        %1645 = vmatpush1.msra.mxu0 0.0
        %1646 = vmatprep.subr.mxu0 0.0
        %1647 = vmatpush1.msra.mxu0 0.0
        %1648 = vmatprep.subr.mxu0 0.0
        %1649 = vmatpush1.msra.mxu0 0.0
        %1650 = vmatprep.subr.mxu0 0.0
        %1651 = vmatpush1.msra.mxu0 0.0
        %1652 = vmatprep.subr.mxu0 0.0
        %1653 = vmatpush1.msra.mxu0 %v1624
        %1654 = vmatprep.subr.mxu0 0.0
        %1655 = vmatpush1.msra.mxu0 %v1623
        %1656 = vmatprep.subr.mxu0 0.0
        %1657 = vmatpush1.msra.mxu0 %v1622
        %1658 = vmatprep.subr.mxu0 0.0
        %1659 = vmatpush1.msra.mxu0 %v1621
        %1660 = vmatprep.subr.mxu0 0.0
        %1661 = vmatpush2.msra.mxu0 0.0
        %1662 = vmatprep.subr.mxu0 0.0
        %1663 = vmatpush2.msra.mxu0 0.0
        %1664 = vmatprep.subr.mxu0 0.0
        %1665 = vmatpush2.msra.mxu0 0.0
        %1666 = vmatprep.subr.mxu0 0.0
        %1667 = vmatpush2.msra.mxu0 0.0
        %1668 = vmatprep.subr.mxu0 0.0
        %1669 = vmatpush2.msra.mxu0 0.0
        %1670 = vmatprep.subr.mxu0 0.0
        %1671 = vmatpush2.msra.mxu0 0.0
        %1672 = vmatprep.subr.mxu0 0.0
        %1673 = vmatpush2.msra.mxu0 0.0
        %1674 = vmatprep.subr.mxu0 0.0
        %1675 = vmatpush2.msra.mxu0 0.0
        %1676 = vmatprep.subr.mxu0 0.0
        %1677 = vmatpush2.msra.mxu0 0.0
        %1678 = vmatprep.subr.mxu0 0.0
        %1679 = vmatpush2.msra.mxu0 0.0
        %1680 = vmatprep.subr.mxu0 0.0
        %1681 = vmatpush2.msra.mxu0 0.0
        %1682 = vmatprep.subr.mxu0 0.0
        %1683 = vmatpush2.msra.mxu0 0.0
        %1684 = vmatprep.subr.mxu0 0.0
        %1685 = vmatpush2.msra.mxu0 0.0
        %1686 = vmatprep.subr.mxu0 0.0
        %1687 = vmatpush2.msra.mxu0 0.0
        %1688 = vmatprep.subr.mxu0 0.0
        %1689 = vmatpush2.msra.mxu0 0.0
        %1690 = vmatprep.subr.mxu0 0.0
        %1691 = vmatpush2.msra.mxu0 0.0
        %1692 = vmatprep.mubr.f32.mxu0 0.0
        %1693 = vmatmul.mubr.f32.gmra.mxu0 %v1626
        %v1694 = vpop.f32.mrf.mxu0
        %v1695 = vadd.f32 0.0, %v1694
        %v1696 = vpop.f32.mrf.mxu0
        %1697 = vdwg.mxu0
        %v1698 = vadd.f32 %v1535, %v1695
        %v1699 = vtanh.pop %v1698
        %1700 = vst.msk [vmem:[#allocation2 + $0x10] sm:$0xff] %vm663, %v1699
        %v1701 = vld [vmem:[#allocation2] sm:$0xff]
        %v1702 = vld [vmem:[#allocation2 + $0x8] sm:$0xff]
        %v1703 = vld [vmem:[#allocation2 + $0x10] sm:$0xff]
        %s1704 = scalar_lea.vmem %s10, 32
        %v1705 = vld [vmem:[%s1704] sm:$0xff]
        %v1706 = vld [vmem:[%s1704 + $0x8] sm:$0xff]
        %v1707 = vld [vmem:[%s1704 + $0x10] sm:$0xff]
        %v1708 = vld [vmem:[%s1704 + $0x18] sm:$0xff]
        %s1709 = scalar_lea.vmem %s11, 1
        %v1710 = vld [vmem:[%s1709] sm:$0x1]
        %v1712 = vlaneseq
        %v1713 = vshrl.u32 %v1712, 7
        %v1714 = vsub.s32 0, %v1713
        %v1715 = vrot.slane %v1710, %v1714
        %v1718 = vsel %vm663, %v1701, 0
        %v1721 = vsel %vm663, %v1702, 0
        %v1724 = vsel %vm663, %v1703, 0
        %1726 = vmatprep.subr.mxu0 0.0
        %1727 = vmatpush1.msra.mxu0 0.0
        %1728 = vmatprep.subr.mxu0 0.0
        %1729 = vmatpush1.msra.mxu0 0.0
        %1730 = vmatprep.subr.mxu0 0.0
        %1731 = vmatpush1.msra.mxu0 0.0
        %1732 = vmatprep.subr.mxu0 0.0
        %1733 = vmatpush1.msra.mxu0 0.0
        %1734 = vmatprep.subr.mxu0 0.0
        %1735 = vmatpush1.msra.mxu0 0.0
        %1736 = vmatprep.subr.mxu0 0.0
        %1737 = vmatpush1.msra.mxu0 0.0
        %1738 = vmatprep.subr.mxu0 0.0
        %1739 = vmatpush1.msra.mxu0 0.0
        %1740 = vmatprep.subr.mxu0 0.0
        %1741 = vmatpush1.msra.mxu0 0.0
        %1742 = vmatprep.subr.mxu0 0.0
        %1743 = vmatpush1.msra.mxu0 0.0
        %1744 = vmatprep.subr.mxu0 0.0
        %1745 = vmatpush1.msra.mxu0 0.0
        %1746 = vmatprep.subr.mxu0 0.0
        %1747 = vmatpush1.msra.mxu0 0.0
        %1748 = vmatprep.subr.mxu0 0.0
        %1749 = vmatpush1.msra.mxu0 0.0
        %1750 = vmatprep.subr.mxu0 0.0
        %1751 = vmatpush1.msra.mxu0 %v1708
        %1752 = vmatprep.subr.mxu0 0.0
        %1753 = vmatpush1.msra.mxu0 %v1707
        %1754 = vmatprep.subr.mxu0 0.0
        %1755 = vmatpush1.msra.mxu0 %v1706
        %1756 = vmatprep.subr.mxu0 0.0
        %1757 = vmatpush1.msra.mxu0 %v1705
        %1758 = vmatprep.subr.mxu0 0.0
        %1759 = vmatpush2.msra.mxu0 0.0
        %1760 = vmatprep.subr.mxu0 0.0
        %1761 = vmatpush2.msra.mxu0 0.0
        %1762 = vmatprep.subr.mxu0 0.0
        %1763 = vmatpush2.msra.mxu0 0.0
        %1764 = vmatprep.subr.mxu0 0.0
        %1765 = vmatpush2.msra.mxu0 0.0
        %1766 = vmatprep.subr.mxu0 0.0
        %1767 = vmatpush2.msra.mxu0 0.0
        %1768 = vmatprep.subr.mxu0 0.0
        %1769 = vmatpush2.msra.mxu0 0.0
        %1770 = vmatprep.subr.mxu0 0.0
        %1771 = vmatpush2.msra.mxu0 0.0
        %1772 = vmatprep.subr.mxu0 0.0
        %1773 = vmatpush2.msra.mxu0 0.0
        %1774 = vmatprep.subr.mxu0 0.0
        %1775 = vmatpush2.msra.mxu0 0.0
        %1776 = vmatprep.subr.mxu0 0.0
        %1777 = vmatpush2.msra.mxu0 0.0
        %1778 = vmatprep.subr.mxu0 0.0
        %1779 = vmatpush2.msra.mxu0 0.0
        %1780 = vmatprep.subr.mxu0 0.0
        %1781 = vmatpush2.msra.mxu0 0.0
        %1782 = vmatprep.subr.mxu0 0.0
        %1783 = vmatpush2.msra.mxu0 0.0
        %1784 = vmatprep.subr.mxu0 0.0
        %1785 = vmatpush2.msra.mxu0 0.0
        %1786 = vmatprep.subr.mxu0 0.0
        %1787 = vmatpush2.msra.mxu0 0.0
        %1788 = vmatprep.subr.mxu0 0.0
        %1789 = vmatpush2.msra.mxu0 0.0
        %1790 = vmatprep.mubr.f32.mxu0 0.0
        %1791 = vmatmul.mubr.f32.gmra.mxu0 %v1718
        %v1792 = vpop.f32.mrf.mxu0
        %v1793 = vadd.f32 %v1715, %v1792
        %v1794 = vpop.f32.mrf.mxu0
        %1795 = vmatprep.mubr.f32.mxu0 0.0
        %1796 = vmatmul.mubr.f32.gmra.mxu0 %v1721
        %v1797 = vpop.f32.mrf.mxu0
        %v1798 = vadd.f32 %v1715, %v1797
        %v1799 = vpop.f32.mrf.mxu0
        %1800 = vmatprep.mubr.f32.mxu0 0.0
        %1801 = vmatmul.mubr.f32.gmra.mxu0 %v1724
        %v1802 = vpop.f32.mrf.mxu0
        %v1803 = vadd.f32 %v1715, %v1802
        %v1804 = vpop.f32.mrf.mxu0
        %1805 = vdwg.mxu0
        %v1806 = vld [vmem:[%s5] sm:$0xff]
        %v1807 = vld [vmem:[%s5 + $0x8] sm:$0xff]
        %v1808 = vld [vmem:[%s5 + $0x10] sm:$0xff]
        %v1810 = vsel %vm573, %v1806, 0
        %v1813 = vsel %vm573, %v1807, 0
        %v1816 = vsel %vm573, %v1808, 0
        %1818 = vmatprep.subr.mxu0 0.0
        %1819 = vmatpush1.msra.mxu0 0.0
        %1820 = vmatprep.subr.mxu0 0.0
        %1821 = vmatpush1.msra.mxu0 0.0
        %1822 = vmatprep.subr.mxu0 0.0
        %1823 = vmatpush1.msra.mxu0 0.0
        %1824 = vmatprep.subr.mxu0 0.0
        %1825 = vmatpush1.msra.mxu0 0.0
        %1826 = vmatprep.subr.mxu0 0.0
        %1827 = vmatpush1.msra.mxu0 0.0
        %1828 = vmatprep.subr.mxu0 0.0
        %1829 = vmatpush1.msra.mxu0 0.0
        %1830 = vmatprep.subr.mxu0 0.0
        %1831 = vmatpush1.msra.mxu0 0.0
        %1832 = vmatprep.subr.mxu0 0.0
        %1833 = vmatpush1.msra.mxu0 0.0
        %1834 = vmatprep.subr.mxu0 0.0
        %1835 = vmatpush1.msra.mxu0 0.0
        %1836 = vmatprep.subr.mxu0 0.0
        %1837 = vmatpush1.msra.mxu0 0.0
        %1838 = vmatprep.subr.mxu0 0.0
        %1839 = vmatpush1.msra.mxu0 0.0
        %1840 = vmatprep.subr.mxu0 0.0
        %1841 = vmatpush1.msra.mxu0 0.0
        %1842 = vmatprep.subr.mxu0 0.0
        %1843 = vmatpush1.msra.mxu0 0.0
        %1844 = vmatprep.subr.mxu0 0.0
        %1845 = vmatpush1.msra.mxu0 %v1803
        %1846 = vmatprep.subr.mxu0 0.0
        %1847 = vmatpush1.msra.mxu0 %v1798
        %1848 = vmatprep.subr.mxu0 0.0
        %1849 = vmatpush1.msra.mxu0 %v1793
        %1850 = vmatprep.subr.mxu0 0.0
        %1851 = vmatpush2.msra.mxu0 0.0
        %1852 = vmatprep.subr.mxu0 0.0
        %1853 = vmatpush2.msra.mxu0 0.0
        %1854 = vmatprep.subr.mxu0 0.0
        %1855 = vmatpush2.msra.mxu0 0.0
        %1856 = vmatprep.subr.mxu0 0.0
        %1857 = vmatpush2.msra.mxu0 0.0
        %1858 = vmatprep.subr.mxu0 0.0
        %1859 = vmatpush2.msra.mxu0 0.0
        %1860 = vmatprep.subr.mxu0 0.0
        %1861 = vmatpush2.msra.mxu0 0.0
        %1862 = vmatprep.subr.mxu0 0.0
        %1863 = vmatpush2.msra.mxu0 0.0
        %1864 = vmatprep.subr.mxu0 0.0
        %1865 = vmatpush2.msra.mxu0 0.0
        %1866 = vmatprep.subr.mxu0 0.0
        %1867 = vmatpush2.msra.mxu0 0.0
        %1868 = vmatprep.subr.mxu0 0.0
        %1869 = vmatpush2.msra.mxu0 0.0
        %1870 = vmatprep.subr.mxu0 0.0
        %1871 = vmatpush2.msra.mxu0 0.0
        %1872 = vmatprep.subr.mxu0 0.0
        %1873 = vmatpush2.msra.mxu0 0.0
        %1874 = vmatprep.subr.mxu0 0.0
        %1875 = vmatpush2.msra.mxu0 0.0
        %1876 = vmatprep.subr.mxu0 0.0
        %1877 = vmatpush2.msra.mxu0 0.0
        %1878 = vmatprep.subr.mxu0 0.0
        %1879 = vmatpush2.msra.mxu0 0.0
        %1880 = vmatprep.subr.mxu0 0.0
        %1881 = vmatpush2.msra.mxu0 0.0
        %1882 = vmatprep.mubr.f32.mxu0 0.0
        %1883 = vmatmul.mubr.f32.gmra.mxu0 %v1810
        %v1884 = vpop.f32.mrf.mxu0
        %v1885 = vadd.f32 0.0, %v1884
        %v1886 = vpop.f32.mrf.mxu0
        %1887 = vmatprep.mubr.f32.mxu0 0.0
        %1888 = vmatmul.mubr.f32.gmra.mxu0 %v1813
        %v1889 = vpop.f32.mrf.mxu0
        %v1890 = vadd.f32 0.0, %v1889
        %v1891 = vpop.f32.mrf.mxu0
        %1892 = vmatprep.mubr.f32.mxu0 0.0
        %1893 = vmatmul.mubr.f32.gmra.mxu0 %v1816
        %v1894 = vpop.f32.mrf.mxu0
        %v1895 = vadd.f32 0.0, %v1894
        %v1896 = vpop.f32.mrf.mxu0
        %1897 = vdwg.mxu0
        %v1898 = vsel %vm663, %v1885, 0.0
        %1899 = vadd.xlane.f32.xlu0 %v1898
        %v1900 = vpop.xlane.xlu0 %1899
        %v1901 = vsel %vm663, %v1890, 0.0
        %1902 = vadd.xlane.f32.xlu0 %v1901
        %v1903 = vpop.xlane.xlu0 %1902
        %v1904 = vsel %vm663, %v1895, 0.0
        %1905 = vadd.xlane.f32.xlu0 %v1904
        %v1906 = vpop.xlane.xlu0 %1905
        %v1907 = vsub.f32 %v1793, %v1900
        %v1908 = vsub.f32 %v1798, %v1903
        %v1909 = vsub.f32 %v1803, %v1906
        %v1910 = vmul.f32 %v1907, %v1907
        %v1911 = vmul.f32 %v1908, %v1908
        %v1912 = vmul.f32 %v1909, %v1909
        %1913 = vmatprep.subr.mxu0 0.0
        %1914 = vmatpush1.msra.mxu0 0.0
        %1915 = vmatprep.subr.mxu0 0.0
        %1916 = vmatpush1.msra.mxu0 0.0
        %1917 = vmatprep.subr.mxu0 0.0
        %1918 = vmatpush1.msra.mxu0 0.0
        %1919 = vmatprep.subr.mxu0 0.0
        %1920 = vmatpush1.msra.mxu0 0.0
        %1921 = vmatprep.subr.mxu0 0.0
        %1922 = vmatpush1.msra.mxu0 0.0
        %1923 = vmatprep.subr.mxu0 0.0
        %1924 = vmatpush1.msra.mxu0 0.0
        %1925 = vmatprep.subr.mxu0 0.0
        %1926 = vmatpush1.msra.mxu0 0.0
        %1927 = vmatprep.subr.mxu0 0.0
        %1928 = vmatpush1.msra.mxu0 0.0
        %1929 = vmatprep.subr.mxu0 0.0
        %1930 = vmatpush1.msra.mxu0 0.0
        %1931 = vmatprep.subr.mxu0 0.0
        %1932 = vmatpush1.msra.mxu0 0.0
        %1933 = vmatprep.subr.mxu0 0.0
        %1934 = vmatpush1.msra.mxu0 0.0
        %1935 = vmatprep.subr.mxu0 0.0
        %1936 = vmatpush1.msra.mxu0 0.0
        %1937 = vmatprep.subr.mxu0 0.0
        %1938 = vmatpush1.msra.mxu0 0.0
        %1939 = vmatprep.subr.mxu0 0.0
        %1940 = vmatpush1.msra.mxu0 %v1912
        %1941 = vmatprep.subr.mxu0 0.0
        %1942 = vmatpush1.msra.mxu0 %v1911
        %1943 = vmatprep.subr.mxu0 0.0
        %1944 = vmatpush1.msra.mxu0 %v1910
        %1945 = vmatprep.subr.mxu0 0.0
        %1946 = vmatpush2.msra.mxu0 0.0
        %1947 = vmatprep.subr.mxu0 0.0
        %1948 = vmatpush2.msra.mxu0 0.0
        %1949 = vmatprep.subr.mxu0 0.0
        %1950 = vmatpush2.msra.mxu0 0.0
        %1951 = vmatprep.subr.mxu0 0.0
        %1952 = vmatpush2.msra.mxu0 0.0
        %1953 = vmatprep.subr.mxu0 0.0
        %1954 = vmatpush2.msra.mxu0 0.0
        %1955 = vmatprep.subr.mxu0 0.0
        %1956 = vmatpush2.msra.mxu0 0.0
        %1957 = vmatprep.subr.mxu0 0.0
        %1958 = vmatpush2.msra.mxu0 0.0
        %1959 = vmatprep.subr.mxu0 0.0
        %1960 = vmatpush2.msra.mxu0 0.0
        %1961 = vmatprep.subr.mxu0 0.0
        %1962 = vmatpush2.msra.mxu0 0.0
        %1963 = vmatprep.subr.mxu0 0.0
        %1964 = vmatpush2.msra.mxu0 0.0
        %1965 = vmatprep.subr.mxu0 0.0
        %1966 = vmatpush2.msra.mxu0 0.0
        %1967 = vmatprep.subr.mxu0 0.0
        %1968 = vmatpush2.msra.mxu0 0.0
        %1969 = vmatprep.subr.mxu0 0.0
        %1970 = vmatpush2.msra.mxu0 0.0
        %1971 = vmatprep.subr.mxu0 0.0
        %1972 = vmatpush2.msra.mxu0 0.0
        %1973 = vmatprep.subr.mxu0 0.0
        %1974 = vmatpush2.msra.mxu0 0.0
        %1975 = vmatprep.subr.mxu0 0.0
        %1976 = vmatpush2.msra.mxu0 0.0
        %1977 = vmatprep.mubr.f32.mxu0 0.0
        %1978 = vmatmul.mubr.f32.gmra.mxu0 %v1810
        %v1979 = vpop.f32.mrf.mxu0
        %v1980 = vadd.f32 0.0, %v1979
        %v1981 = vpop.f32.mrf.mxu0
        %1982 = vmatprep.mubr.f32.mxu0 0.0
        %1983 = vmatmul.mubr.f32.gmra.mxu0 %v1813
        %v1984 = vpop.f32.mrf.mxu0
        %v1985 = vadd.f32 0.0, %v1984
        %v1986 = vpop.f32.mrf.mxu0
        %1987 = vmatprep.mubr.f32.mxu0 0.0
        %1988 = vmatmul.mubr.f32.gmra.mxu0 %v1816
        %v1989 = vpop.f32.mrf.mxu0
        %v1990 = vadd.f32 0.0, %v1989
        %v1991 = vpop.f32.mrf.mxu0
        %1992 = vdwg.mxu0
        %v1993 = vsel %vm663, %v1980, 0.0
        %1994 = vadd.xlane.f32.xlu0 %v1993
        %v1995 = vpop.xlane.xlu0 %1994
        %v1996 = vsel %vm663, %v1985, 0.0
        %1997 = vadd.xlane.f32.xlu0 %v1996
        %v1998 = vpop.xlane.xlu0 %1997
        %v1999 = vsel %vm663, %v1990, 0.0
        %2000 = vadd.xlane.f32.xlu0 %v1999
        %v2001 = vpop.xlane.xlu0 %2000
        %v2002 = vld [vmem:[%s3] sm:$0xff]
        %v2003 = vld [vmem:[%s3 + $0x8] sm:$0xff]
        %v2004 = vld [vmem:[%s3 + $0x10] sm:$0xff]
        %v2005 = vadd.f32 %v1995, 1e-05
        %v2006 = vadd.f32 %v1998, 1e-05
        %v2007 = vadd.f32 %v2001, 1e-05
        %v2008 = vrsqrt.pop %v2005
        %v2009 = vrsqrt.pop %v2006
        %v2010 = vrsqrt.pop %v2007
        %v2011 = vmul.f32 %v2002, %v2008
        %v2012 = vmul.f32 %v2003, %v2009
        %v2013 = vmul.f32 %v2004, %v2010
        %2015 = vset.pattern.permute.xlu0 0
        %2016 = vperm.xlu0 %2015, %v2011
        %v2017 = vpop.permute.xlu0 %2016
        %2020 = vset.pattern.permute.xlu0 0
        %2021 = vperm.xlu0 %2020, %v2012
        %v2022 = vpop.permute.xlu0 %2021
        %2025 = vset.pattern.permute.xlu0 0
        %2026 = vperm.xlu0 %2025, %v2013
        %v2027 = vpop.permute.xlu0 %2026
        %v2029 = vmul.f32 %v1907, %v2017
        %v2030 = vmul.f32 %v1908, %v2022
        %v2031 = vmul.f32 %v1909, %v2027
        %v2032 = vld [vmem:[%s4] sm:$0xff]
        %v2033 = vld [vmem:[%s4 + $0x8] sm:$0xff]
        %v2034 = vld [vmem:[%s4 + $0x10] sm:$0xff]
        %2036 = vset.pattern.permute.xlu0 0
        %2037 = vperm.xlu0 %2036, %v2032
        %v2038 = vpop.permute.xlu0 %2037
        %2041 = vset.pattern.permute.xlu0 0
        %2042 = vperm.xlu0 %2041, %v2033
        %v2043 = vpop.permute.xlu0 %2042
        %2046 = vset.pattern.permute.xlu0 0
        %2047 = vperm.xlu0 %2046, %v2034
        %v2048 = vpop.permute.xlu0 %2047
        %v2050 = vadd.f32 %v2029, %v2038
        %v2051 = vadd.f32 %v2030, %v2043
        %v2052 = vadd.f32 %v2031, %v2048
        %v2053 = vadd.f32 %v2050, %v2051
        %v2054 = vadd.f32 %v2053, %v2052
        %v2055 = vld [vmem:[%s12] sm:$0xff]
        %v2056 = vld [vmem:[%s12 + $0x8] sm:$0xff]
        %v2057 = vld [vmem:[%s12 + $0x10] sm:$0xff]
        %v2058 = vld [vmem:[%s12 + $0x18] sm:$0xff]
        %v2059 = vld [vmem:[%s13] sm:$0x1]
        %v2060 = vmul.f32 %v2059, 3.0
        %v2062 = vlaneseq
        %v2063 = vshrl.u32 %v2062, 7
        %v2064 = vsub.s32 0, %v2063
        %v2065 = vrot.slane %v2060, %v2064
        %v2068 = vsel %vm663, %v2054, 0
        %2070 = vmatprep.subr.mxu0 0.0
        %2071 = vmatpush1.msra.mxu0 0.0
        %2072 = vmatprep.subr.mxu0 0.0
        %2073 = vmatpush1.msra.mxu0 0.0
        %2074 = vmatprep.subr.mxu0 0.0
        %2075 = vmatpush1.msra.mxu0 0.0
        %2076 = vmatprep.subr.mxu0 0.0
        %2077 = vmatpush1.msra.mxu0 0.0
        %2078 = vmatprep.subr.mxu0 0.0
        %2079 = vmatpush1.msra.mxu0 0.0
        %2080 = vmatprep.subr.mxu0 0.0
        %2081 = vmatpush1.msra.mxu0 0.0
        %2082 = vmatprep.subr.mxu0 0.0
        %2083 = vmatpush1.msra.mxu0 0.0
        %2084 = vmatprep.subr.mxu0 0.0
        %2085 = vmatpush1.msra.mxu0 0.0
        %2086 = vmatprep.subr.mxu0 0.0
        %2087 = vmatpush1.msra.mxu0 0.0
        %2088 = vmatprep.subr.mxu0 0.0
        %2089 = vmatpush1.msra.mxu0 0.0
        %2090 = vmatprep.subr.mxu0 0.0
        %2091 = vmatpush1.msra.mxu0 0.0
        %2092 = vmatprep.subr.mxu0 0.0
        %2093 = vmatpush1.msra.mxu0 0.0
        %2094 = vmatprep.subr.mxu0 0.0
        %2095 = vmatpush1.msra.mxu0 %v2058
        %2096 = vmatprep.subr.mxu0 0.0
        %2097 = vmatpush1.msra.mxu0 %v2057
        %2098 = vmatprep.subr.mxu0 0.0
        %2099 = vmatpush1.msra.mxu0 %v2056
        %2100 = vmatprep.subr.mxu0 0.0
        %2101 = vmatpush1.msra.mxu0 %v2055
        %2102 = vmatprep.subr.mxu0 0.0
        %2103 = vmatpush2.msra.mxu0 0.0
        %2104 = vmatprep.subr.mxu0 0.0
        %2105 = vmatpush2.msra.mxu0 0.0
        %2106 = vmatprep.subr.mxu0 0.0
        %2107 = vmatpush2.msra.mxu0 0.0
        %2108 = vmatprep.subr.mxu0 0.0
        %2109 = vmatpush2.msra.mxu0 0.0
        %2110 = vmatprep.subr.mxu0 0.0
        %2111 = vmatpush2.msra.mxu0 0.0
        %2112 = vmatprep.subr.mxu0 0.0
        %2113 = vmatpush2.msra.mxu0 0.0
        %2114 = vmatprep.subr.mxu0 0.0
        %2115 = vmatpush2.msra.mxu0 0.0
        %2116 = vmatprep.subr.mxu0 0.0
        %2117 = vmatpush2.msra.mxu0 0.0
        %2118 = vmatprep.subr.mxu0 0.0
        %2119 = vmatpush2.msra.mxu0 0.0
        %2120 = vmatprep.subr.mxu0 0.0
        %2121 = vmatpush2.msra.mxu0 0.0
        %2122 = vmatprep.subr.mxu0 0.0
        %2123 = vmatpush2.msra.mxu0 0.0
        %2124 = vmatprep.subr.mxu0 0.0
        %2125 = vmatpush2.msra.mxu0 0.0
        %2126 = vmatprep.subr.mxu0 0.0
        %2127 = vmatpush2.msra.mxu0 0.0
        %2128 = vmatprep.subr.mxu0 0.0
        %2129 = vmatpush2.msra.mxu0 0.0
        %2130 = vmatprep.subr.mxu0 0.0
        %2131 = vmatpush2.msra.mxu0 0.0
        %2132 = vmatprep.subr.mxu0 0.0
        %2133 = vmatpush2.msra.mxu0 0.0
        %2134 = vmatprep.mubr.f32.mxu0 0.0
        %2135 = vmatmul.mubr.f32.gmra.mxu0 %v2068
        %v2136 = vpop.f32.mrf.mxu0
        %v2137 = vadd.f32 %v2065, %v2136
        %v2138 = vpop.f32.mrf.mxu0
        %2139 = vdwg.mxu0
        %2140 = vst [vmem:[%s461] sm:$0xff] %v2137
        %s2141 = sand.u32 %s335, 1
        %s2142 = scalar_lea.sflag [#allocation4], %s2141
        %s2143 = sand.u32 %s335, 1
        %s2144 = smul.addr %s2143, 8
        %s2145 = scalar_lea.vmem [#allocation3], %s2144
        // Predicated region
        $region77: #{transformer_forward.1} parent=75 // pred_check
          %p2146 = pneg %p345
        $region78: #{transformer_forward.1} parent=75 // pred_check_branch
          %2148 = sbr.rel (%p2146) target = $region80
        $region79: #{transformer_forward.1} parent=75 // pred_region
          %s2150 = ssub.s32 128, 128
          %2151 = vsyncadd %s2142, %s2150
          %s2152 = smul.addr %s28, 128
          %s2153 = scalar_lea.hbm %s14, %s2152
          %s2155 = sshll.u32 %s2145, 4
          %s2156 = int_to_ptr.vmem [resolvable:$true] %s2155
          %2158 = dma.vmem_to_hbm [thread:$0]  %s2156, 128, %s2153, %s2142
        $region80: #{transformer_forward.1} parent=75 // pred_fallthru
          _
      $region76: #{transformer_forward.1} parent=5 // pred_fallthru
        _
      %p2159 = scmp.le.s32.totalorder 2, %s23
      // Predicated region
      $region81: #{transformer_forward.1} parent=5 // pred_check
        %p2160 = pneg %p2159
      $region82: #{transformer_forward.1} parent=5 // pred_check_branch
        %2162 = sbr.rel (%p2160) target = $region84
      $region83: #{transformer_forward.1} parent=5 // pred_region
        %s2163 = ssub.s32 %s23, 2
        // Predicated region
        $region85: #{transformer_forward.1} parent=83 // pred_check
          %p2164 = pneg %p351
        $region86: #{transformer_forward.1} parent=83 // pred_check_branch
          %2166 = sbr.rel (%p2164) target = $region88
        $region87: #{transformer_forward.1} parent=83 // pred_region
          %s2167 = sand.u32 %s336, 1
          %s2168 = scalar_lea.sflag [#allocation4], %s2167
          %s2169 = sand.u32 %s336, 1
          %s2170 = smul.addr %s2169, 8
          %s2171 = scalar_lea.vmem [#allocation3], %s2170
          %2172 = dma.done %s2168, 128
        $region88: #{transformer_forward.1} parent=83 // pred_fallthru
          _
      $region84: #{transformer_forward.1} parent=5 // pred_fallthru
        _
    $region6: #{transformer_forward.1} parent=1 // loop_footer
      %s27 = sadd.s32 1, %s23
    $region7: #{transformer_forward.1} parent=1 // loop_footer_branch
      %22 = sbr.rel target = $region3
    $region8: #{transformer_forward.1} parent=1 // loop_exit
      _
    %2173 = vsyncpa [#allocation4], 1
    %s2174 = scalar_lea.sflag [#allocation4], 1
    %2175 = vsyncpa %s2174, 1

</llo_original>
